<compile_context>
chip_gen: v5e
topology: v5e:2x2
jax: 0.10.0
libtpu: 0.0.40
codegen_flags: <defaults>
</compile_context>

<pallas_src>
import functools

import jax
import jax.numpy as jnp
from jax import lax
from jax.experimental import pallas as pl
from jax.experimental.pallas import tpu as pltpu


def _round_up(x, m):
    return ((x + m - 1) // m) * m


def _vmem_capacity_bytes():
    try:
        return int(pltpu.get_tpu_info().vmem_capacity_bytes)
    except Exception:
        return 64 << 20          # conservative: v7x has 64 MiB per TensorCore


# -----------------------------------------------------------------------------
# Shared epilogue: log-sigmoid + regularizer partial sums for one batch tile.
# -----------------------------------------------------------------------------
def _finalize_tile(pos_scores, neg_mean_score, row_reg, mf_ref, reg_ref, *,
                   tile_rows, batch_size, has_padding):
    diff = pos_scores - neg_mean_score
    # numerically stable log-sigmoid
    log_sig = jnp.minimum(diff, 0.0) - jnp.log1p(jnp.exp(-jnp.abs(diff)))

    def store(mf_val, reg_val):
        mf_ref[...] = jnp.full((1, 8, 128), mf_val, jnp.float32)
        reg_ref[...] = jnp.full((1, 8, 128), reg_val, jnp.float32)

    if not has_padding:
        # Common case: every tile is full -> no iota / masking work at all.
        store(jnp.sum(log_sig), jnp.sum(row_reg))
    else:
        t = pl.program_id(0)
        is_last = t == pl.num_programs(0) - 1

        @pl.when(jnp.logical_not(is_last))
        def _():
            store(jnp.sum(log_sig), jnp.sum(row_reg))

        @pl.when(is_last)
        def _():
            row_id = t * tile_rows + lax.broadcasted_iota(
                jnp.int32, (tile_rows, 1), 0)
            valid = row_id < batch_size
            store(jnp.sum(jnp.where(valid, log_sig, 0.0)),
                  jnp.sum(jnp.where(valid, row_reg, 0.0)))


# -----------------------------------------------------------------------------
# Path A: embedding table resident in VMEM -> gather with dynamic vector loads.
# -----------------------------------------------------------------------------
def bpr_vmem_kernel(u_idx_ref, p_idx_ref, n_idx_ref,    # SMEM (scalar prefetch)
                    emb_ref,                            # full table in VMEM
                    mf_ref, reg_ref,                    # (1, 8, 128) partials
                    u_buf, pos_buf, nsum_buf, nsq_buf,  # VMEM scratch
                    *, tile_rows, n_negs, batch_size, has_padding, row_unroll):
    base = pl.program_id(0) * tile_rows
    d = emb_ref.shape[1]

    def gather_row(r, carry):
        ui = u_idx_ref[base + r]
        u_buf[pl.ds(r, 1), :] = emb_ref[pl.ds(ui, 1), :]
        pi = p_idx_ref[base + r]
        pos_buf[pl.ds(r, 1), :] = emb_ref[pl.ds(pi, 1), :]
        nbase = (base + r) * n_negs                 # hoisted out of the neg loop
        ns = jnp.zeros((1, d), jnp.float32)
        nq = jnp.zeros((1, d), jnp.float32)
        for n in range(n_negs):                     # static: fully unrolled
            row = emb_ref[pl.ds(n_idx_ref[nbase + n], 1), :].astype(jnp.float32)
            ns = ns + row
            nq = nq + row * row
        nsum_buf[pl.ds(r, 1), :] = ns
        nsq_buf[pl.ds(r, 1), :] = nq
        return carry

    lax.fori_loop(0, tile_rows, gather_row, 0, unroll=row_unroll)

    u = u_buf[...].astype(jnp.float32)
    p = pos_buf[...].astype(jnp.float32)
    pos_scores = jnp.sum(u * p, axis=1, keepdims=True)                    # [T,1]
    neg_mean = jnp.sum(u * nsum_buf[...], axis=1, keepdims=True) * (1.0 / n_negs)
    row_reg = jnp.sum(u * u + p * p + nsq_buf[...], axis=1, keepdims=True)

    _finalize_tile(pos_scores, neg_mean, row_reg, mf_ref, reg_ref,
                   tile_rows=tile_rows, batch_size=batch_size,
                   has_padding=has_padding)


# -----------------------------------------------------------------------------
# Path B: table stays in HBM -> per-row DMAs, unrolled issue + grouped waits.
# -----------------------------------------------------------------------------
def bpr_hbm_kernel(u_idx_ref, p_idx_ref, n_idx_ref,     # SMEM (scalar prefetch)
                   emb_ref,                             # table, memory_space=ANY
                   mf_ref, reg_ref,                     # (1, 8, 128) partials
                   u_buf, pos_buf, neg_buf, sems,       # VMEM scratch + DMA sems
                   *, tile_rows, n_negs, batch_size, has_padding, row_unroll):
    base = pl.program_id(0) * tile_rows

    # ---- issue: (N+2) row DMAs per batch row; rows partially unrolled,
    #      negatives fully unrolled so the LLO scheduler can co-issue SMEM
    #      index loads, address math, and descriptor pushes. ----
    def issue_row(r, carry):
        ui = u_idx_ref[base + r]
        pltpu.make_async_copy(emb_ref.at[pl.ds(ui, 1)],
                              u_buf.at[pl.ds(r, 1)], sems.at[0]).start()
        pi = p_idx_ref[base + r]
        pltpu.make_async_copy(emb_ref.at[pl.ds(pi, 1)],
                              pos_buf.at[pl.ds(r, 1)], sems.at[1]).start()
        nbase = (base + r) * n_negs                 # hoisted out of the neg loop
        for n in range(n_negs):                     # static: fully unrolled
            ni = n_idx_ref[nbase + n]
            pltpu.make_async_copy(emb_ref.at[pl.ds(ni, 1)],
                                  neg_buf.at[n, pl.ds(r, 1)], sems.at[2]).start()
        return carry

    lax.fori_loop(0, tile_rows, issue_row, 0, unroll=row_unroll)

    # ---- grouped drains: DMA semaphores count bytes, so one wait sized to the
    #      whole destination buffer covers all of that stream's row copies. ----
    pltpu.make_async_copy(u_buf, u_buf, sems.at[0]).wait()
    pltpu.make_async_copy(pos_buf, pos_buf, sems.at[1]).wait()

    # u/p VALU work overlaps the still-in-flight negative DMAs.
    u = u_buf[...].astype(jnp.float32)
    p = pos_buf[...].astype(jnp.float32)
    pos_scores = jnp.sum(u * p, axis=1, keepdims=True)                    # [T,1]
    up_sq = u * u + p * p                                                 # [T,D]

    pltpu.make_async_copy(neg_buf, neg_buf, sems.at[2]).wait()

    # Negatives: pure-VALU running sums over n; reduce across D only once.
    def neg_body(n, carry):
        acc_sum, acc_sq = carry
        nb = neg_buf[n].astype(jnp.float32)                               # [T,D]
        return acc_sum + nb, acc_sq + nb * nb

    neg_sum, neg_sq = lax.fori_loop(
        0, n_negs, neg_body, (jnp.zeros_like(u), jnp.zeros_like(u)), unroll=True)

    neg_mean = jnp.sum(u * neg_sum, axis=1, keepdims=True) * (1.0 / n_negs)
    row_reg = jnp.sum(up_sq + neg_sq, axis=1, keepdims=True)

    _finalize_tile(pos_scores, neg_mean, row_reg, mf_ref, reg_ref,
                   tile_rows=tile_rows, batch_size=batch_size,
                   has_padding=has_padding)
    # TODO(synk): cross-tile double-buffering (2x gather scratch + issuing tile
    # t+1's DMAs before draining tile t) would hide the remaining HBM gather
    # latency; kept single-buffered for clarity.


# -----------------------------------------------------------------------------
# Wrapper
# -----------------------------------------------------------------------------
def bpr_forward(all_embed, user, pos_item, neg_item, *, n_users, decay,
                tile_rows=512, force_path=None):
    """Mirrors Recommender.forward: returns (loss + emb_loss, loss, emb_loss)."""
    B, N = neg_item.shape
    n_nodes, D = all_embed.shape
    itemsize = jnp.dtype(all_embed.dtype).itemsize

    # Global row indices into all_embed (items live after the first n_users rows).
    u_idx = user.astype(jnp.int32)
    p_idx = pos_item.astype(jnp.int32) + jnp.int32(n_users)
    n_idx = neg_item.astype(jnp.int32).reshape(-1) + jnp.int32(n_users)   # [B*N]
    # TODO(synk): at production sizes (B*N large) move n_idx out of scalar
    # prefetch (SMEM) and DMA only the current tile's indices per grid step.

    vmem_cap = _vmem_capacity_bytes()
    table_bytes = n_nodes * D * itemsize
    # VMEM fast path if a (double-buffered) copy of the table leaves at least
    # half of VMEM free for scratch + pipeline buffers.
    use_vmem_table = 2 * table_bytes <= vmem_cap // 2
    if force_path == "hbm":
        use_vmem_table = False
    elif force_path == "vmem":
        use_vmem_table = True

    # ---- tile sizing ----
    row_align = 16 if itemsize < 4 else 8          # native sublane tiling
    # >= 2 tiles whenever the batch allows it: v7x shards the "parallel" grid
    # axis over its 2 TensorCores (negligible overhead on v5e/v6e).
    T = max(row_align,
            min(int(tile_rows), _round_up(max(1, (B + 1) // 2), row_align)))

    def _scratch_bytes(tt):
        if use_vmem_table:
            return 2 * tt * D * itemsize + 2 * tt * D * 4
        return (2 + N) * tt * D * itemsize

    scratch_budget = int(0.8 * vmem_cap) - (2 * table_bytes if use_vmem_table else 0)
    while _scratch_bytes(T) > scratch_budget and T > row_align:
        T = max(row_align, _round_up(T // 2, row_align))

    num_tiles = _round_up(B, T) // T
    Bp = num_tiles * T
    has_padding = Bp != B
    if has_padding:  # pad with row 0 (valid address); masked in the last tile
        u_idx = jnp.pad(u_idx, (0, Bp - B))
        p_idx = jnp.pad(p_idx, (0, Bp - B))
        n_idx = jnp.pad(n_idx, (0, (Bp - B) * N))

    row_unroll = min(8, T)
    common = dict(tile_rows=T, n_negs=N, batch_size=B,
                  has_padding=has_padding, row_unroll=row_unroll)

    out_specs = (
        pl.BlockSpec((1, 8, 128), lambda t, u, p, n: (t, 0, 0)),
        pl.BlockSpec((1, 8, 128), lambda t, u, p, n: (t, 0, 0)),
    )
    out_shape = (
        jax.ShapeDtypeStruct((num_tiles, 8, 128), jnp.float32),
        jax.ShapeDtypeStruct((num_tiles, 8, 128), jnp.float32),
    )
    out_bytes = 2 * 2 * 8 * 128 * 4                # two outputs, double-buffered

    if use_vmem_table:
        kernel = functools.partial(bpr_vmem_kernel, **common)
        in_specs = [pl.BlockSpec((n_nodes, D), lambda t, u, p, n: (0, 0))]
        scratch_shapes = [
            pltpu.VMEM((T, D), all_embed.dtype),   # gathered user rows
            pltpu.VMEM((T, D), all_embed.dtype),   # gathered pos rows
            pltpu.VMEM((T, D), jnp.float32),       # running sum over negatives
            pltpu.VMEM((T, D), jnp.float32),       # running sum of neg^2
        ]
        vmem_needed = 2 * table_bytes + _scratch_bytes(T) + out_bytes
    else:
        kernel = functools.partial(bpr_hbm_kernel, **common)
        in_specs = [pl.BlockSpec(memory_space=pl.ANY)]   # table stays in HBM
        scratch_shapes = [
            pltpu.VMEM((T, D), all_embed.dtype),
            pltpu.VMEM((T, D), all_embed.dtype),
            pltpu.VMEM((N, T, D), all_embed.dtype),
            pltpu.SemaphoreType.DMA((3,)),
        ]
        vmem_needed = _scratch_bytes(T) + out_bytes

    vmem_limit = int(min(max(32 << 20, vmem_needed * 5 // 4 + (2 << 20)),
                         int(0.9 * vmem_cap)))

    grid_spec = pltpu.PrefetchScalarGridSpec(
        num_scalar_prefetch=3,
        grid=(num_tiles,),
        in_specs=in_specs,
        out_specs=out_specs,
        scratch_shapes=scratch_shapes,
    )

    cost = pl.CostEstimate(
        flops=int(5 * B * (N + 2) * D),
        transcendentals=int(2 * B),
        bytes_accessed=int((N + 2) * B * D * itemsize),
    )

    mf_parts, reg_parts = pl.pallas_call(
        kernel,
        grid_spec=grid_spec,
        out_shape=out_shape,
        compiler_params=pltpu.CompilerParams(
            dimension_semantics=("parallel",),
            vmem_limit_bytes=vmem_limit,
        ),
        cost_estimate=cost,
    )(u_idx, p_idx, n_idx, all_embed)

    mf_sum = jnp.sum(mf_parts[:, 0, 0])
    reg_sum = jnp.sum(reg_parts[:, 0, 0])

    mf_loss = -mf_sum / jnp.float32(B)
    emb_loss = jnp.float32(decay) * (0.5 * reg_sum) / jnp.float32(B)
    return mf_loss + emb_loss, mf_loss, emb_loss


def bpr_forward_ref(all_embed, user, pos_item, neg_item, *, n_users, decay):
    """Pure-JAX reference of the PyTorch forward for validation."""
    user_emb = all_embed[:n_users, :]
    item_emb = all_embed[n_users:, :]
    u_e = user_emb[user]
    pos_e = item_emb[pos_item]
    B, N = neg_item.shape
    D = all_embed.shape[1]
    neg_e = item_emb[neg_item.reshape(-1)]

    reg = (jnp.sum(u_e ** 2) + jnp.sum(pos_e ** 2) + jnp.sum(neg_e ** 2)) / 2.0
    emb_loss = decay * reg / B

    pos_scores = jnp.sum(u_e * pos_e, axis=1)
    neg_items = neg_e.reshape(B, N, D)
    neg_scores = jnp.sum(u_e[:, None, :] * neg_items, axis=2)
    diff = pos_scores - neg_scores.mean(axis=1)
    mf_loss = -jnp.mean(jax.nn.log_sigmoid(diff))
    return mf_loss + emb_loss, mf_loss, emb_loss


if __name__ == "__main__":
    # Synthetic "args" / "data_stat" (small, deterministic)
    n_users = 16
    n_items = 32
    n_nodes = n_users + n_items
    emb_size = 128        # args.dim; a multiple of 128 keeps lanes fully dense
    decay = 1e-4          # args.l2
    batch_size = 12       # deliberately not a multiple of the tile (tests masking)
    n_negs = 4

    key = jax.random.PRNGKey(0)
    k_emb, k_u, k_p, k_n = jax.random.split(key, 4)

    # Xavier-uniform init of all_embed [n_nodes, emb_size]
    bound = (6.0 / (n_nodes + emb_size)) ** 0.5
    all_embed = jax.random.uniform(
        k_emb, (n_nodes, emb_size), jnp.float32, minval=-bound, maxval=bound
    )

    user = jax.random.randint(k_u, (batch_size,), 0, n_users, jnp.int32)
    pos_item = jax.random.randint(k_p, (batch_size,), 0, n_items, jnp.int32)
    neg_item = jax.random.randint(k_n, (batch_size, n_negs), 0, n_items, jnp.int32)

    ref = bpr_forward_ref(all_embed, user, pos_item, neg_item,
                          n_users=n_users, decay=decay)

    # Exercise both gather paths (2 tiles each, last tile padded & masked).
    for path in ("vmem", "hbm"):
        total, mf, emb = bpr_forward(
            all_embed, user, pos_item, neg_item,
            n_users=n_users, decay=decay, tile_rows=8, force_path=path,
        )
        jax.block_until_ready(total)
        assert jnp.allclose(total, ref[0], rtol=1e-4, atol=1e-6), (path, total, ref[0])
        assert jnp.allclose(mf, ref[1], rtol=1e-4, atol=1e-6), (path, mf, ref[1])
        assert jnp.allclose(emb, ref[2], rtol=1e-4, atol=1e-6), (path, emb, ref[2])

    print("KERNEL_OK")
</pallas_src>

<mosaic_0001>
module attributes {stable_mosaic.version = 11 : i64} {
  func.func @bpr_vmem_kernel(%arg0: i32, %arg1: memref<16xi32, #tpu.memory_space<smem>>, %arg2: memref<16xi32, #tpu.memory_space<smem>>, %arg3: memref<64xi32, #tpu.memory_space<smem>>, %arg4: memref<48x128xf32, #tpu.memory_space<vmem>>, %arg5: memref<1x8x128xf32, #tpu.memory_space<vmem>>, %arg6: memref<1x8x128xf32, #tpu.memory_space<vmem>>, %arg7: memref<8x128xf32, #tpu.memory_space<vmem>>, %arg8: memref<8x128xf32, #tpu.memory_space<vmem>>, %arg9: memref<8x128xf32, #tpu.memory_space<vmem>>, %arg10: memref<8x128xf32, #tpu.memory_space<vmem>>) attributes {dimension_semantics = [#tpu.dimension_semantics<parallel>], iteration_bounds = array<i64: 2>, scalar_prefetch = 3 : i64, scratch_operands = 4 : i64, tpu.core_type = #tpu.core_type<tc>, window_params = [{pipeline_mode = #tpu.pipeline_mode<synchronous>, transform_indices = @transform_0, window_bounds = array<i64: 48, 128>}, {transform_indices = @transform_1, window_bounds = array<i64: 1, 8, 128>}, {transform_indices = @transform_2, window_bounds = array<i64: 1, 8, 128>}]} {
    %c8_i32 = arith.constant 8 : i32
    %0 = arith.muli %arg0, %c8_i32 : i32
    %c0_i32 = arith.constant 0 : i32
    %1 = arith.addi %0, %c0_i32 : i32
    %2 = arith.index_cast %1 : i32 to index
    %3 = memref.load %arg1[%2] : memref<16xi32, #tpu.memory_space<smem>>
    %4 = arith.index_cast %3 : i32 to index
    %c0 = arith.constant 0 : index
    %5 = vector.load %arg4[%4, %c0] : memref<48x128xf32, #tpu.memory_space<vmem>>, vector<1x128xf32>
    %6 = arith.index_cast %c0_i32 : i32 to index
    %c0_0 = arith.constant 0 : index
    %7 = vector.load %arg7[%6, %c0_0] : memref<8x128xf32, #tpu.memory_space<vmem>>, vector<1x128xf32>
    tpu.vector_store %arg7[%6, %c0_0], %5 {strides = array<i32>} : memref<8x128xf32, #tpu.memory_space<vmem>>, vector<1x128xf32>,
    %8 = arith.addi %0, %c0_i32 : i32
    %9 = arith.index_cast %8 : i32 to index
    %10 = memref.load %arg2[%9] : memref<16xi32, #tpu.memory_space<smem>>
    %11 = arith.index_cast %10 : i32 to index
    %c0_1 = arith.constant 0 : index
    %12 = vector.load %arg4[%11, %c0_1] : memref<48x128xf32, #tpu.memory_space<vmem>>, vector<1x128xf32>
    %13 = arith.index_cast %c0_i32 : i32 to index
    %c0_2 = arith.constant 0 : index
    %14 = vector.load %arg8[%13, %c0_2] : memref<8x128xf32, #tpu.memory_space<vmem>>, vector<1x128xf32>
    tpu.vector_store %arg8[%13, %c0_2], %12 {strides = array<i32>} : memref<8x128xf32, #tpu.memory_space<vmem>>, vector<1x128xf32>,
    %15 = arith.addi %0, %c0_i32 : i32
    %c4_i32 = arith.constant 4 : i32
    %16 = arith.muli %15, %c4_i32 : i32
    %cst = arith.constant 0.000000e+00 : f32
    %17 = vector.broadcast %cst : f32 to vector<1x128xf32>
    %cst_3 = arith.constant 0.000000e+00 : f32
    %18 = vector.broadcast %cst_3 : f32 to vector<1x128xf32>
    %c0_i32_4 = arith.constant 0 : i32
    %19 = arith.addi %16, %c0_i32_4 : i32
    %20 = arith.index_cast %19 : i32 to index
    %21 = memref.load %arg3[%20] : memref<64xi32, #tpu.memory_space<smem>>
    %22 = arith.index_cast %21 : i32 to index
    %c0_5 = arith.constant 0 : index
    %23 = vector.load %arg4[%22, %c0_5] : memref<48x128xf32, #tpu.memory_space<vmem>>, vector<1x128xf32>
    %24 = arith.addf %17, %23 : vector<1x128xf32>
    %25 = arith.mulf %23, %23 : vector<1x128xf32>
    %26 = arith.addf %18, %25 : vector<1x128xf32>
    %c1_i32 = arith.constant 1 : i32
    %27 = arith.addi %16, %c1_i32 : i32
    %28 = arith.index_cast %27 : i32 to index
    %29 = memref.load %arg3[%28] : memref<64xi32, #tpu.memory_space<smem>>
    %30 = arith.index_cast %29 : i32 to index
    %c0_6 = arith.constant 0 : index
    %31 = vector.load %arg4[%30, %c0_6] : memref<48x128xf32, #tpu.memory_space<vmem>>, vector<1x128xf32>
    %32 = arith.addf %24, %31 : vector<1x128xf32>
    %33 = arith.mulf %31, %31 : vector<1x128xf32>
    %34 = arith.addf %26, %33 : vector<1x128xf32>
    %c2_i32 = arith.constant 2 : i32
    %35 = arith.addi %16, %c2_i32 : i32
    %36 = arith.index_cast %35 : i32 to index
    %37 = memref.load %arg3[%36] : memref<64xi32, #tpu.memory_space<smem>>
    %38 = arith.index_cast %37 : i32 to index
    %c0_7 = arith.constant 0 : index
    %39 = vector.load %arg4[%38, %c0_7] : memref<48x128xf32, #tpu.memory_space<vmem>>, vector<1x128xf32>
    %40 = arith.addf %32, %39 : vector<1x128xf32>
    %41 = arith.mulf %39, %39 : vector<1x128xf32>
    %42 = arith.addf %34, %41 : vector<1x128xf32>
    %c3_i32 = arith.constant 3 : i32
    %43 = arith.addi %16, %c3_i32 : i32
    %44 = arith.index_cast %43 : i32 to index
    %45 = memref.load %arg3[%44] : memref<64xi32, #tpu.memory_space<smem>>
    %46 = arith.index_cast %45 : i32 to index
    %c0_8 = arith.constant 0 : index
    %47 = vector.load %arg4[%46, %c0_8] : memref<48x128xf32, #tpu.memory_space<vmem>>, vector<1x128xf32>
    %48 = arith.addf %40, %47 : vector<1x128xf32>
    %49 = arith.mulf %47, %47 : vector<1x128xf32>
    %50 = arith.addf %42, %49 : vector<1x128xf32>
    %51 = arith.index_cast %c0_i32 : i32 to index
    %c0_9 = arith.constant 0 : index
    %52 = vector.load %arg9[%51, %c0_9] : memref<8x128xf32, #tpu.memory_space<vmem>>, vector<1x128xf32>
    tpu.vector_store %arg9[%51, %c0_9], %48 {strides = array<i32>} : memref<8x128xf32, #tpu.memory_space<vmem>>, vector<1x128xf32>,
    %53 = arith.index_cast %c0_i32 : i32 to index
    %c0_10 = arith.constant 0 : index
    %54 = vector.load %arg10[%53, %c0_10] : memref<8x128xf32, #tpu.memory_space<vmem>>, vector<1x128xf32>
    tpu.vector_store %arg10[%53, %c0_10], %50 {strides = array<i32>} : memref<8x128xf32, #tpu.memory_space<vmem>>, vector<1x128xf32>,
    %c1_i32_11 = arith.constant 1 : i32
    %55 = arith.addi %0, %c1_i32_11 : i32
    %56 = arith.index_cast %55 : i32 to index
    %57 = memref.load %arg1[%56] : memref<16xi32, #tpu.memory_space<smem>>
    %58 = arith.index_cast %57 : i32 to index
    %c0_12 = arith.constant 0 : index
    %59 = vector.load %arg4[%58, %c0_12] : memref<48x128xf32, #tpu.memory_space<vmem>>, vector<1x128xf32>
    %60 = arith.index_cast %c1_i32_11 : i32 to index
    %c0_13 = arith.constant 0 : index
    %61 = vector.load %arg7[%60, %c0_13] : memref<8x128xf32, #tpu.memory_space<vmem>>, vector<1x128xf32>
    tpu.vector_store %arg7[%60, %c0_13], %59 {strides = array<i32>} : memref<8x128xf32, #tpu.memory_space<vmem>>, vector<1x128xf32>,
    %62 = arith.addi %0, %c1_i32_11 : i32
    %63 = arith.index_cast %62 : i32 to index
    %64 = memref.load %arg2[%63] : memref<16xi32, #tpu.memory_space<smem>>
    %65 = arith.index_cast %64 : i32 to index
    %c0_14 = arith.constant 0 : index
    %66 = vector.load %arg4[%65, %c0_14] : memref<48x128xf32, #tpu.memory_space<vmem>>, vector<1x128xf32>
    %67 = arith.index_cast %c1_i32_11 : i32 to index
    %c0_15 = arith.constant 0 : index
    %68 = vector.load %arg8[%67, %c0_15] : memref<8x128xf32, #tpu.memory_space<vmem>>, vector<1x128xf32>
    tpu.vector_store %arg8[%67, %c0_15], %66 {strides = array<i32>} : memref<8x128xf32, #tpu.memory_space<vmem>>, vector<1x128xf32>,
    %69 = arith.addi %0, %c1_i32_11 : i32
    %c4_i32_16 = arith.constant 4 : i32
    %70 = arith.muli %69, %c4_i32_16 : i32
    %cst_17 = arith.constant 0.000000e+00 : f32
    %71 = vector.broadcast %cst_17 : f32 to vector<1x128xf32>
    %cst_18 = arith.constant 0.000000e+00 : f32
    %72 = vector.broadcast %cst_18 : f32 to vector<1x128xf32>
    %c0_i32_19 = arith.constant 0 : i32
    %73 = arith.addi %70, %c0_i32_19 : i32
    %74 = arith.index_cast %73 : i32 to index
    %75 = memref.load %arg3[%74] : memref<64xi32, #tpu.memory_space<smem>>
    %76 = arith.index_cast %75 : i32 to index
    %c0_20 = arith.constant 0 : index
    %77 = vector.load %arg4[%76, %c0_20] : memref<48x128xf32, #tpu.memory_space<vmem>>, vector<1x128xf32>
    %78 = arith.addf %71, %77 : vector<1x128xf32>
    %79 = arith.mulf %77, %77 : vector<1x128xf32>
    %80 = arith.addf %72, %79 : vector<1x128xf32>
    %c1_i32_21 = arith.constant 1 : i32
    %81 = arith.addi %70, %c1_i32_21 : i32
    %82 = arith.index_cast %81 : i32 to index
    %83 = memref.load %arg3[%82] : memref<64xi32, #tpu.memory_space<smem>>
    %84 = arith.index_cast %83 : i32 to index
    %c0_22 = arith.constant 0 : index
    %85 = vector.load %arg4[%84, %c0_22] : memref<48x128xf32, #tpu.memory_space<vmem>>, vector<1x128xf32>
    %86 = arith.addf %78, %85 : vector<1x128xf32>
    %87 = arith.mulf %85, %85 : vector<1x128xf32>
    %88 = arith.addf %80, %87 : vector<1x128xf32>
    %c2_i32_23 = arith.constant 2 : i32
    %89 = arith.addi %70, %c2_i32_23 : i32
    %90 = arith.index_cast %89 : i32 to index
    %91 = memref.load %arg3[%90] : memref<64xi32, #tpu.memory_space<smem>>
    %92 = arith.index_cast %91 : i32 to index
    %c0_24 = arith.constant 0 : index
    %93 = vector.load %arg4[%92, %c0_24] : memref<48x128xf32, #tpu.memory_space<vmem>>, vector<1x128xf32>
    %94 = arith.addf %86, %93 : vector<1x128xf32>
    %95 = arith.mulf %93, %93 : vector<1x128xf32>
    %96 = arith.addf %88, %95 : vector<1x128xf32>
    %c3_i32_25 = arith.constant 3 : i32
    %97 = arith.addi %70, %c3_i32_25 : i32
    %98 = arith.index_cast %97 : i32 to index
    %99 = memref.load %arg3[%98] : memref<64xi32, #tpu.memory_space<smem>>
    %100 = arith.index_cast %99 : i32 to index
    %c0_26 = arith.constant 0 : index
    %101 = vector.load %arg4[%100, %c0_26] : memref<48x128xf32, #tpu.memory_space<vmem>>, vector<1x128xf32>
    %102 = arith.addf %94, %101 : vector<1x128xf32>
    %103 = arith.mulf %101, %101 : vector<1x128xf32>
    %104 = arith.addf %96, %103 : vector<1x128xf32>
    %105 = arith.index_cast %c1_i32_11 : i32 to index
    %c0_27 = arith.constant 0 : index
    %106 = vector.load %arg9[%105, %c0_27] : memref<8x128xf32, #tpu.memory_space<vmem>>, vector<1x128xf32>
    tpu.vector_store %arg9[%105, %c0_27], %102 {strides = array<i32>} : memref<8x128xf32, #tpu.memory_space<vmem>>, vector<1x128xf32>,
    %107 = arith.index_cast %c1_i32_11 : i32 to index
    %c0_28 = arith.constant 0 : index
    %108 = vector.load %arg10[%107, %c0_28] : memref<8x128xf32, #tpu.memory_space<vmem>>, vector<1x128xf32>
    tpu.vector_store %arg10[%107, %c0_28], %104 {strides = array<i32>} : memref<8x128xf32, #tpu.memory_space<vmem>>, vector<1x128xf32>,
    %c2_i32_29 = arith.constant 2 : i32
    %109 = arith.addi %0, %c2_i32_29 : i32
    %110 = arith.index_cast %109 : i32 to index
    %111 = memref.load %arg1[%110] : memref<16xi32, #tpu.memory_space<smem>>
    %112 = arith.index_cast %111 : i32 to index
    %c0_30 = arith.constant 0 : index
    %113 = vector.load %arg4[%112, %c0_30] : memref<48x128xf32, #tpu.memory_space<vmem>>, vector<1x128xf32>
    %114 = arith.index_cast %c2_i32_29 : i32 to index
    %c0_31 = arith.constant 0 : index
    %115 = vector.load %arg7[%114, %c0_31] : memref<8x128xf32, #tpu.memory_space<vmem>>, vector<1x128xf32>
    tpu.vector_store %arg7[%114, %c0_31], %113 {strides = array<i32>} : memref<8x128xf32, #tpu.memory_space<vmem>>, vector<1x128xf32>,
    %116 = arith.addi %0, %c2_i32_29 : i32
    %117 = arith.index_cast %116 : i32 to index
    %118 = memref.load %arg2[%117] : memref<16xi32, #tpu.memory_space<smem>>
    %119 = arith.index_cast %118 : i32 to index
    %c0_32 = arith.constant 0 : index
    %120 = vector.load %arg4[%119, %c0_32] : memref<48x128xf32, #tpu.memory_space<vmem>>, vector<1x128xf32>
    %121 = arith.index_cast %c2_i32_29 : i32 to index
    %c0_33 = arith.constant 0 : index
    %122 = vector.load %arg8[%121, %c0_33] : memref<8x128xf32, #tpu.memory_space<vmem>>, vector<1x128xf32>
    tpu.vector_store %arg8[%121, %c0_33], %120 {strides = array<i32>} : memref<8x128xf32, #tpu.memory_space<vmem>>, vector<1x128xf32>,
    %123 = arith.addi %0, %c2_i32_29 : i32
    %c4_i32_34 = arith.constant 4 : i32
    %124 = arith.muli %123, %c4_i32_34 : i32
    %cst_35 = arith.constant 0.000000e+00 : f32
    %125 = vector.broadcast %cst_35 : f32 to vector<1x128xf32>
    %cst_36 = arith.constant 0.000000e+00 : f32
    %126 = vector.broadcast %cst_36 : f32 to vector<1x128xf32>
    %c0_i32_37 = arith.constant 0 : i32
    %127 = arith.addi %124, %c0_i32_37 : i32
    %128 = arith.index_cast %127 : i32 to index
    %129 = memref.load %arg3[%128] : memref<64xi32, #tpu.memory_space<smem>>
    %130 = arith.index_cast %129 : i32 to index
    %c0_38 = arith.constant 0 : index
    %131 = vector.load %arg4[%130, %c0_38] : memref<48x128xf32, #tpu.memory_space<vmem>>, vector<1x128xf32>
    %132 = arith.addf %125, %131 : vector<1x128xf32>
    %133 = arith.mulf %131, %131 : vector<1x128xf32>
    %134 = arith.addf %126, %133 : vector<1x128xf32>
    %c1_i32_39 = arith.constant 1 : i32
    %135 = arith.addi %124, %c1_i32_39 : i32
    %136 = arith.index_cast %135 : i32 to index
    %137 = memref.load %arg3[%136] : memref<64xi32, #tpu.memory_space<smem>>
    %138 = arith.index_cast %137 : i32 to index
    %c0_40 = arith.constant 0 : index
    %139 = vector.load %arg4[%138, %c0_40] : memref<48x128xf32, #tpu.memory_space<vmem>>, vector<1x128xf32>
    %140 = arith.addf %132, %139 : vector<1x128xf32>
    %141 = arith.mulf %139, %139 : vector<1x128xf32>
    %142 = arith.addf %134, %141 : vector<1x128xf32>
    %c2_i32_41 = arith.constant 2 : i32
    %143 = arith.addi %124, %c2_i32_41 : i32
    %144 = arith.index_cast %143 : i32 to index
    %145 = memref.load %arg3[%144] : memref<64xi32, #tpu.memory_space<smem>>
    %146 = arith.index_cast %145 : i32 to index
    %c0_42 = arith.constant 0 : index
    %147 = vector.load %arg4[%146, %c0_42] : memref<48x128xf32, #tpu.memory_space<vmem>>, vector<1x128xf32>
    %148 = arith.addf %140, %147 : vector<1x128xf32>
    %149 = arith.mulf %147, %147 : vector<1x128xf32>
    %150 = arith.addf %142, %149 : vector<1x128xf32>
    %c3_i32_43 = arith.constant 3 : i32
    %151 = arith.addi %124, %c3_i32_43 : i32
    %152 = arith.index_cast %151 : i32 to index
    %153 = memref.load %arg3[%152] : memref<64xi32, #tpu.memory_space<smem>>
    %154 = arith.index_cast %153 : i32 to index
    %c0_44 = arith.constant 0 : index
    %155 = vector.load %arg4[%154, %c0_44] : memref<48x128xf32, #tpu.memory_space<vmem>>, vector<1x128xf32>
    %156 = arith.addf %148, %155 : vector<1x128xf32>
    %157 = arith.mulf %155, %155 : vector<1x128xf32>
    %158 = arith.addf %150, %157 : vector<1x128xf32>
    %159 = arith.index_cast %c2_i32_29 : i32 to index
    %c0_45 = arith.constant 0 : index
    %160 = vector.load %arg9[%159, %c0_45] : memref<8x128xf32, #tpu.memory_space<vmem>>, vector<1x128xf32>
    tpu.vector_store %arg9[%159, %c0_45], %156 {strides = array<i32>} : memref<8x128xf32, #tpu.memory_space<vmem>>, vector<1x128xf32>,
    %161 = arith.index_cast %c2_i32_29 : i32 to index
    %c0_46 = arith.constant 0 : index
    %162 = vector.load %arg10[%161, %c0_46] : memref<8x128xf32, #tpu.memory_space<vmem>>, vector<1x128xf32>
    tpu.vector_store %arg10[%161, %c0_46], %158 {strides = array<i32>} : memref<8x128xf32, #tpu.memory_space<vmem>>, vector<1x128xf32>,
    %c3_i32_47 = arith.constant 3 : i32
    %163 = arith.addi %0, %c3_i32_47 : i32
    %164 = arith.index_cast %163 : i32 to index
    %165 = memref.load %arg1[%164] : memref<16xi32, #tpu.memory_space<smem>>
    %166 = arith.index_cast %165 : i32 to index
    %c0_48 = arith.constant 0 : index
    %167 = vector.load %arg4[%166, %c0_48] : memref<48x128xf32, #tpu.memory_space<vmem>>, vector<1x128xf32>
    %168 = arith.index_cast %c3_i32_47 : i32 to index
    %c0_49 = arith.constant 0 : index
    %169 = vector.load %arg7[%168, %c0_49] : memref<8x128xf32, #tpu.memory_space<vmem>>, vector<1x128xf32>
    tpu.vector_store %arg7[%168, %c0_49], %167 {strides = array<i32>} : memref<8x128xf32, #tpu.memory_space<vmem>>, vector<1x128xf32>,
    %170 = arith.addi %0, %c3_i32_47 : i32
    %171 = arith.index_cast %170 : i32 to index
    %172 = memref.load %arg2[%171] : memref<16xi32, #tpu.memory_space<smem>>
    %173 = arith.index_cast %172 : i32 to index
    %c0_50 = arith.constant 0 : index
    %174 = vector.load %arg4[%173, %c0_50] : memref<48x128xf32, #tpu.memory_space<vmem>>, vector<1x128xf32>
    %175 = arith.index_cast %c3_i32_47 : i32 to index
    %c0_51 = arith.constant 0 : index
    %176 = vector.load %arg8[%175, %c0_51] : memref<8x128xf32, #tpu.memory_space<vmem>>, vector<1x128xf32>
    tpu.vector_store %arg8[%175, %c0_51], %174 {strides = array<i32>} : memref<8x128xf32, #tpu.memory_space<vmem>>, vector<1x128xf32>,
    %177 = arith.addi %0, %c3_i32_47 : i32
    %c4_i32_52 = arith.constant 4 : i32
    %178 = arith.muli %177, %c4_i32_52 : i32
    %cst_53 = arith.constant 0.000000e+00 : f32
    %179 = vector.broadcast %cst_53 : f32 to vector<1x128xf32>
    %cst_54 = arith.constant 0.000000e+00 : f32
    %180 = vector.broadcast %cst_54 : f32 to vector<1x128xf32>
    %c0_i32_55 = arith.constant 0 : i32
    %181 = arith.addi %178, %c0_i32_55 : i32
    %182 = arith.index_cast %181 : i32 to index
    %183 = memref.load %arg3[%182] : memref<64xi32, #tpu.memory_space<smem>>
    %184 = arith.index_cast %183 : i32 to index
    %c0_56 = arith.constant 0 : index
    %185 = vector.load %arg4[%184, %c0_56] : memref<48x128xf32, #tpu.memory_space<vmem>>, vector<1x128xf32>
    %186 = arith.addf %179, %185 : vector<1x128xf32>
    %187 = arith.mulf %185, %185 : vector<1x128xf32>
    %188 = arith.addf %180, %187 : vector<1x128xf32>
    %c1_i32_57 = arith.constant 1 : i32
    %189 = arith.addi %178, %c1_i32_57 : i32
    %190 = arith.index_cast %189 : i32 to index
    %191 = memref.load %arg3[%190] : memref<64xi32, #tpu.memory_space<smem>>
    %192 = arith.index_cast %191 : i32 to index
    %c0_58 = arith.constant 0 : index
    %193 = vector.load %arg4[%192, %c0_58] : memref<48x128xf32, #tpu.memory_space<vmem>>, vector<1x128xf32>
    %194 = arith.addf %186, %193 : vector<1x128xf32>
    %195 = arith.mulf %193, %193 : vector<1x128xf32>
    %196 = arith.addf %188, %195 : vector<1x128xf32>
    %c2_i32_59 = arith.constant 2 : i32
    %197 = arith.addi %178, %c2_i32_59 : i32
    %198 = arith.index_cast %197 : i32 to index
    %199 = memref.load %arg3[%198] : memref<64xi32, #tpu.memory_space<smem>>
    %200 = arith.index_cast %199 : i32 to index
    %c0_60 = arith.constant 0 : index
    %201 = vector.load %arg4[%200, %c0_60] : memref<48x128xf32, #tpu.memory_space<vmem>>, vector<1x128xf32>
    %202 = arith.addf %194, %201 : vector<1x128xf32>
    %203 = arith.mulf %201, %201 : vector<1x128xf32>
    %204 = arith.addf %196, %203 : vector<1x128xf32>
    %c3_i32_61 = arith.constant 3 : i32
    %205 = arith.addi %178, %c3_i32_61 : i32
    %206 = arith.index_cast %205 : i32 to index
    %207 = memref.load %arg3[%206] : memref<64xi32, #tpu.memory_space<smem>>
    %208 = arith.index_cast %207 : i32 to index
    %c0_62 = arith.constant 0 : index
    %209 = vector.load %arg4[%208, %c0_62] : memref<48x128xf32, #tpu.memory_space<vmem>>, vector<1x128xf32>
    %210 = arith.addf %202, %209 : vector<1x128xf32>
    %211 = arith.mulf %209, %209 : vector<1x128xf32>
    %212 = arith.addf %204, %211 : vector<1x128xf32>
    %213 = arith.index_cast %c3_i32_47 : i32 to index
    %c0_63 = arith.constant 0 : index
    %214 = vector.load %arg9[%213, %c0_63] : memref<8x128xf32, #tpu.memory_space<vmem>>, vector<1x128xf32>
    tpu.vector_store %arg9[%213, %c0_63], %210 {strides = array<i32>} : memref<8x128xf32, #tpu.memory_space<vmem>>, vector<1x128xf32>,
    %215 = arith.index_cast %c3_i32_47 : i32 to index
    %c0_64 = arith.constant 0 : index
    %216 = vector.load %arg10[%215, %c0_64] : memref<8x128xf32, #tpu.memory_space<vmem>>, vector<1x128xf32>
    tpu.vector_store %arg10[%215, %c0_64], %212 {strides = array<i32>} : memref<8x128xf32, #tpu.memory_space<vmem>>, vector<1x128xf32>,
    %c4_i32_65 = arith.constant 4 : i32
    %217 = arith.addi %0, %c4_i32_65 : i32
    %218 = arith.index_cast %217 : i32 to index
    %219 = memref.load %arg1[%218] : memref<16xi32, #tpu.memory_space<smem>>
    %220 = arith.index_cast %219 : i32 to index
    %c0_66 = arith.constant 0 : index
    %221 = vector.load %arg4[%220, %c0_66] : memref<48x128xf32, #tpu.memory_space<vmem>>, vector<1x128xf32>
    %222 = arith.index_cast %c4_i32_65 : i32 to index
    %c0_67 = arith.constant 0 : index
    %223 = vector.load %arg7[%222, %c0_67] : memref<8x128xf32, #tpu.memory_space<vmem>>, vector<1x128xf32>
    tpu.vector_store %arg7[%222, %c0_67], %221 {strides = array<i32>} : memref<8x128xf32, #tpu.memory_space<vmem>>, vector<1x128xf32>,
    %224 = arith.addi %0, %c4_i32_65 : i32
    %225 = arith.index_cast %224 : i32 to index
    %226 = memref.load %arg2[%225] : memref<16xi32, #tpu.memory_space<smem>>
    %227 = arith.index_cast %226 : i32 to index
    %c0_68 = arith.constant 0 : index
    %228 = vector.load %arg4[%227, %c0_68] : memref<48x128xf32, #tpu.memory_space<vmem>>, vector<1x128xf32>
    %229 = arith.index_cast %c4_i32_65 : i32 to index
    %c0_69 = arith.constant 0 : index
    %230 = vector.load %arg8[%229, %c0_69] : memref<8x128xf32, #tpu.memory_space<vmem>>, vector<1x128xf32>
    tpu.vector_store %arg8[%229, %c0_69], %228 {strides = array<i32>} : memref<8x128xf32, #tpu.memory_space<vmem>>, vector<1x128xf32>,
    %231 = arith.addi %0, %c4_i32_65 : i32
    %c4_i32_70 = arith.constant 4 : i32
    %232 = arith.muli %231, %c4_i32_70 : i32
    %cst_71 = arith.constant 0.000000e+00 : f32
    %233 = vector.broadcast %cst_71 : f32 to vector<1x128xf32>
    %cst_72 = arith.constant 0.000000e+00 : f32
    %234 = vector.broadcast %cst_72 : f32 to vector<1x128xf32>
    %c0_i32_73 = arith.constant 0 : i32
    %235 = arith.addi %232, %c0_i32_73 : i32
    %236 = arith.index_cast %235 : i32 to index
    %237 = memref.load %arg3[%236] : memref<64xi32, #tpu.memory_space<smem>>
    %238 = arith.index_cast %237 : i32 to index
    %c0_74 = arith.constant 0 : index
    %239 = vector.load %arg4[%238, %c0_74] : memref<48x128xf32, #tpu.memory_space<vmem>>, vector<1x128xf32>
    %240 = arith.addf %233, %239 : vector<1x128xf32>
    %241 = arith.mulf %239, %239 : vector<1x128xf32>
    %242 = arith.addf %234, %241 : vector<1x128xf32>
    %c1_i32_75 = arith.constant 1 : i32
    %243 = arith.addi %232, %c1_i32_75 : i32
    %244 = arith.index_cast %243 : i32 to index
    %245 = memref.load %arg3[%244] : memref<64xi32, #tpu.memory_space<smem>>
    %246 = arith.index_cast %245 : i32 to index
    %c0_76 = arith.constant 0 : index
    %247 = vector.load %arg4[%246, %c0_76] : memref<48x128xf32, #tpu.memory_space<vmem>>, vector<1x128xf32>
    %248 = arith.addf %240, %247 : vector<1x128xf32>
    %249 = arith.mulf %247, %247 : vector<1x128xf32>
    %250 = arith.addf %242, %249 : vector<1x128xf32>
    %c2_i32_77 = arith.constant 2 : i32
    %251 = arith.addi %232, %c2_i32_77 : i32
    %252 = arith.index_cast %251 : i32 to index
    %253 = memref.load %arg3[%252] : memref<64xi32, #tpu.memory_space<smem>>
    %254 = arith.index_cast %253 : i32 to index
    %c0_78 = arith.constant 0 : index
    %255 = vector.load %arg4[%254, %c0_78] : memref<48x128xf32, #tpu.memory_space<vmem>>, vector<1x128xf32>
    %256 = arith.addf %248, %255 : vector<1x128xf32>
    %257 = arith.mulf %255, %255 : vector<1x128xf32>
    %258 = arith.addf %250, %257 : vector<1x128xf32>
    %c3_i32_79 = arith.constant 3 : i32
    %259 = arith.addi %232, %c3_i32_79 : i32
    %260 = arith.index_cast %259 : i32 to index
    %261 = memref.load %arg3[%260] : memref<64xi32, #tpu.memory_space<smem>>
    %262 = arith.index_cast %261 : i32 to index
    %c0_80 = arith.constant 0 : index
    %263 = vector.load %arg4[%262, %c0_80] : memref<48x128xf32, #tpu.memory_space<vmem>>, vector<1x128xf32>
    %264 = arith.addf %256, %263 : vector<1x128xf32>
    %265 = arith.mulf %263, %263 : vector<1x128xf32>
    %266 = arith.addf %258, %265 : vector<1x128xf32>
    %267 = arith.index_cast %c4_i32_65 : i32 to index
    %c0_81 = arith.constant 0 : index
    %268 = vector.load %arg9[%267, %c0_81] : memref<8x128xf32, #tpu.memory_space<vmem>>, vector<1x128xf32>
    tpu.vector_store %arg9[%267, %c0_81], %264 {strides = array<i32>} : memref<8x128xf32, #tpu.memory_space<vmem>>, vector<1x128xf32>,
    %269 = arith.index_cast %c4_i32_65 : i32 to index
    %c0_82 = arith.constant 0 : index
    %270 = vector.load %arg10[%269, %c0_82] : memref<8x128xf32, #tpu.memory_space<vmem>>, vector<1x128xf32>
    tpu.vector_store %arg10[%269, %c0_82], %266 {strides = array<i32>} : memref<8x128xf32, #tpu.memory_space<vmem>>, vector<1x128xf32>,
    %c5_i32 = arith.constant 5 : i32
    %271 = arith.addi %0, %c5_i32 : i32
    %272 = arith.index_cast %271 : i32 to index
    %273 = memref.load %arg1[%272] : memref<16xi32, #tpu.memory_space<smem>>
    %274 = arith.index_cast %273 : i32 to index
    %c0_83 = arith.constant 0 : index
    %275 = vector.load %arg4[%274, %c0_83] : memref<48x128xf32, #tpu.memory_space<vmem>>, vector<1x128xf32>
    %276 = arith.index_cast %c5_i32 : i32 to index
    %c0_84 = arith.constant 0 : index
    %277 = vector.load %arg7[%276, %c0_84] : memref<8x128xf32, #tpu.memory_space<vmem>>, vector<1x128xf32>
    tpu.vector_store %arg7[%276, %c0_84], %275 {strides = array<i32>} : memref<8x128xf32, #tpu.memory_space<vmem>>, vector<1x128xf32>,
    %278 = arith.addi %0, %c5_i32 : i32
    %279 = arith.index_cast %278 : i32 to index
    %280 = memref.load %arg2[%279] : memref<16xi32, #tpu.memory_space<smem>>
    %281 = arith.index_cast %280 : i32 to index
    %c0_85 = arith.constant 0 : index
    %282 = vector.load %arg4[%281, %c0_85] : memref<48x128xf32, #tpu.memory_space<vmem>>, vector<1x128xf32>
    %283 = arith.index_cast %c5_i32 : i32 to index
    %c0_86 = arith.constant 0 : index
    %284 = vector.load %arg8[%283, %c0_86] : memref<8x128xf32, #tpu.memory_space<vmem>>, vector<1x128xf32>
    tpu.vector_store %arg8[%283, %c0_86], %282 {strides = array<i32>} : memref<8x128xf32, #tpu.memory_space<vmem>>, vector<1x128xf32>,
    %285 = arith.addi %0, %c5_i32 : i32
    %c4_i32_87 = arith.constant 4 : i32
    %286 = arith.muli %285, %c4_i32_87 : i32
    %cst_88 = arith.constant 0.000000e+00 : f32
    %287 = vector.broadcast %cst_88 : f32 to vector<1x128xf32>
    %cst_89 = arith.constant 0.000000e+00 : f32
    %288 = vector.broadcast %cst_89 : f32 to vector<1x128xf32>
    %c0_i32_90 = arith.constant 0 : i32
    %289 = arith.addi %286, %c0_i32_90 : i32
    %290 = arith.index_cast %289 : i32 to index
    %291 = memref.load %arg3[%290] : memref<64xi32, #tpu.memory_space<smem>>
    %292 = arith.index_cast %291 : i32 to index
    %c0_91 = arith.constant 0 : index
    %293 = vector.load %arg4[%292, %c0_91] : memref<48x128xf32, #tpu.memory_space<vmem>>, vector<1x128xf32>
    %294 = arith.addf %287, %293 : vector<1x128xf32>
    %295 = arith.mulf %293, %293 : vector<1x128xf32>
    %296 = arith.addf %288, %295 : vector<1x128xf32>
    %c1_i32_92 = arith.constant 1 : i32
    %297 = arith.addi %286, %c1_i32_92 : i32
    %298 = arith.index_cast %297 : i32 to index
    %299 = memref.load %arg3[%298] : memref<64xi32, #tpu.memory_space<smem>>
    %300 = arith.index_cast %299 : i32 to index
    %c0_93 = arith.constant 0 : index
    %301 = vector.load %arg4[%300, %c0_93] : memref<48x128xf32, #tpu.memory_space<vmem>>, vector<1x128xf32>
    %302 = arith.addf %294, %301 : vector<1x128xf32>
    %303 = arith.mulf %301, %301 : vector<1x128xf32>
    %304 = arith.addf %296, %303 : vector<1x128xf32>
    %c2_i32_94 = arith.constant 2 : i32
    %305 = arith.addi %286, %c2_i32_94 : i32
    %306 = arith.index_cast %305 : i32 to index
    %307 = memref.load %arg3[%306] : memref<64xi32, #tpu.memory_space<smem>>
    %308 = arith.index_cast %307 : i32 to index
    %c0_95 = arith.constant 0 : index
    %309 = vector.load %arg4[%308, %c0_95] : memref<48x128xf32, #tpu.memory_space<vmem>>, vector<1x128xf32>
    %310 = arith.addf %302, %309 : vector<1x128xf32>
    %311 = arith.mulf %309, %309 : vector<1x128xf32>
    %312 = arith.addf %304, %311 : vector<1x128xf32>
    %c3_i32_96 = arith.constant 3 : i32
    %313 = arith.addi %286, %c3_i32_96 : i32
    %314 = arith.index_cast %313 : i32 to index
    %315 = memref.load %arg3[%314] : memref<64xi32, #tpu.memory_space<smem>>
    %316 = arith.index_cast %315 : i32 to index
    %c0_97 = arith.constant 0 : index
    %317 = vector.load %arg4[%316, %c0_97] : memref<48x128xf32, #tpu.memory_space<vmem>>, vector<1x128xf32>
    %318 = arith.addf %310, %317 : vector<1x128xf32>
    %319 = arith.mulf %317, %317 : vector<1x128xf32>
    %320 = arith.addf %312, %319 : vector<1x128xf32>
    %321 = arith.index_cast %c5_i32 : i32 to index
    %c0_98 = arith.constant 0 : index
    %322 = vector.load %arg9[%321, %c0_98] : memref<8x128xf32, #tpu.memory_space<vmem>>, vector<1x128xf32>
    tpu.vector_store %arg9[%321, %c0_98], %318 {strides = array<i32>} : memref<8x128xf32, #tpu.memory_space<vmem>>, vector<1x128xf32>,
    %323 = arith.index_cast %c5_i32 : i32 to index
    %c0_99 = arith.constant 0 : index
    %324 = vector.load %arg10[%323, %c0_99] : memref<8x128xf32, #tpu.memory_space<vmem>>, vector<1x128xf32>
    tpu.vector_store %arg10[%323, %c0_99], %320 {strides = array<i32>} : memref<8x128xf32, #tpu.memory_space<vmem>>, vector<1x128xf32>,
    %c6_i32 = arith.constant 6 : i32
    %325 = arith.addi %0, %c6_i32 : i32
    %326 = arith.index_cast %325 : i32 to index
    %327 = memref.load %arg1[%326] : memref<16xi32, #tpu.memory_space<smem>>
    %328 = arith.index_cast %327 : i32 to index
    %c0_100 = arith.constant 0 : index
    %329 = vector.load %arg4[%328, %c0_100] : memref<48x128xf32, #tpu.memory_space<vmem>>, vector<1x128xf32>
    %330 = arith.index_cast %c6_i32 : i32 to index
    %c0_101 = arith.constant 0 : index
    %331 = vector.load %arg7[%330, %c0_101] : memref<8x128xf32, #tpu.memory_space<vmem>>, vector<1x128xf32>
    tpu.vector_store %arg7[%330, %c0_101], %329 {strides = array<i32>} : memref<8x128xf32, #tpu.memory_space<vmem>>, vector<1x128xf32>,
    %332 = arith.addi %0, %c6_i32 : i32
    %333 = arith.index_cast %332 : i32 to index
    %334 = memref.load %arg2[%333] : memref<16xi32, #tpu.memory_space<smem>>
    %335 = arith.index_cast %334 : i32 to index
    %c0_102 = arith.constant 0 : index
    %336 = vector.load %arg4[%335, %c0_102] : memref<48x128xf32, #tpu.memory_space<vmem>>, vector<1x128xf32>
    %337 = arith.index_cast %c6_i32 : i32 to index
    %c0_103 = arith.constant 0 : index
    %338 = vector.load %arg8[%337, %c0_103] : memref<8x128xf32, #tpu.memory_space<vmem>>, vector<1x128xf32>
    tpu.vector_store %arg8[%337, %c0_103], %336 {strides = array<i32>} : memref<8x128xf32, #tpu.memory_space<vmem>>, vector<1x128xf32>,
    %339 = arith.addi %0, %c6_i32 : i32
    %c4_i32_104 = arith.constant 4 : i32
    %340 = arith.muli %339, %c4_i32_104 : i32
    %cst_105 = arith.constant 0.000000e+00 : f32
    %341 = vector.broadcast %cst_105 : f32 to vector<1x128xf32>
    %cst_106 = arith.constant 0.000000e+00 : f32
    %342 = vector.broadcast %cst_106 : f32 to vector<1x128xf32>
    %c0_i32_107 = arith.constant 0 : i32
    %343 = arith.addi %340, %c0_i32_107 : i32
    %344 = arith.index_cast %343 : i32 to index
    %345 = memref.load %arg3[%344] : memref<64xi32, #tpu.memory_space<smem>>
    %346 = arith.index_cast %345 : i32 to index
    %c0_108 = arith.constant 0 : index
    %347 = vector.load %arg4[%346, %c0_108] : memref<48x128xf32, #tpu.memory_space<vmem>>, vector<1x128xf32>
    %348 = arith.addf %341, %347 : vector<1x128xf32>
    %349 = arith.mulf %347, %347 : vector<1x128xf32>
    %350 = arith.addf %342, %349 : vector<1x128xf32>
    %c1_i32_109 = arith.constant 1 : i32
    %351 = arith.addi %340, %c1_i32_109 : i32
    %352 = arith.index_cast %351 : i32 to index
    %353 = memref.load %arg3[%352] : memref<64xi32, #tpu.memory_space<smem>>
    %354 = arith.index_cast %353 : i32 to index
    %c0_110 = arith.constant 0 : index
    %355 = vector.load %arg4[%354, %c0_110] : memref<48x128xf32, #tpu.memory_space<vmem>>, vector<1x128xf32>
    %356 = arith.addf %348, %355 : vector<1x128xf32>
    %357 = arith.mulf %355, %355 : vector<1x128xf32>
    %358 = arith.addf %350, %357 : vector<1x128xf32>
    %c2_i32_111 = arith.constant 2 : i32
    %359 = arith.addi %340, %c2_i32_111 : i32
    %360 = arith.index_cast %359 : i32 to index
    %361 = memref.load %arg3[%360] : memref<64xi32, #tpu.memory_space<smem>>
    %362 = arith.index_cast %361 : i32 to index
    %c0_112 = arith.constant 0 : index
    %363 = vector.load %arg4[%362, %c0_112] : memref<48x128xf32, #tpu.memory_space<vmem>>, vector<1x128xf32>
    %364 = arith.addf %356, %363 : vector<1x128xf32>
    %365 = arith.mulf %363, %363 : vector<1x128xf32>
    %366 = arith.addf %358, %365 : vector<1x128xf32>
    %c3_i32_113 = arith.constant 3 : i32
    %367 = arith.addi %340, %c3_i32_113 : i32
    %368 = arith.index_cast %367 : i32 to index
    %369 = memref.load %arg3[%368] : memref<64xi32, #tpu.memory_space<smem>>
    %370 = arith.index_cast %369 : i32 to index
    %c0_114 = arith.constant 0 : index
    %371 = vector.load %arg4[%370, %c0_114] : memref<48x128xf32, #tpu.memory_space<vmem>>, vector<1x128xf32>
    %372 = arith.addf %364, %371 : vector<1x128xf32>
    %373 = arith.mulf %371, %371 : vector<1x128xf32>
    %374 = arith.addf %366, %373 : vector<1x128xf32>
    %375 = arith.index_cast %c6_i32 : i32 to index
    %c0_115 = arith.constant 0 : index
    %376 = vector.load %arg9[%375, %c0_115] : memref<8x128xf32, #tpu.memory_space<vmem>>, vector<1x128xf32>
    tpu.vector_store %arg9[%375, %c0_115], %372 {strides = array<i32>} : memref<8x128xf32, #tpu.memory_space<vmem>>, vector<1x128xf32>,
    %377 = arith.index_cast %c6_i32 : i32 to index
    %c0_116 = arith.constant 0 : index
    %378 = vector.load %arg10[%377, %c0_116] : memref<8x128xf32, #tpu.memory_space<vmem>>, vector<1x128xf32>
    tpu.vector_store %arg10[%377, %c0_116], %374 {strides = array<i32>} : memref<8x128xf32, #tpu.memory_space<vmem>>, vector<1x128xf32>,
    %c7_i32 = arith.constant 7 : i32
    %379 = arith.addi %0, %c7_i32 : i32
    %380 = arith.index_cast %379 : i32 to index
    %381 = memref.load %arg1[%380] : memref<16xi32, #tpu.memory_space<smem>>
    %382 = arith.index_cast %381 : i32 to index
    %c0_117 = arith.constant 0 : index
    %383 = vector.load %arg4[%382, %c0_117] : memref<48x128xf32, #tpu.memory_space<vmem>>, vector<1x128xf32>
    %384 = arith.index_cast %c7_i32 : i32 to index
    %c0_118 = arith.constant 0 : index
    %385 = vector.load %arg7[%384, %c0_118] : memref<8x128xf32, #tpu.memory_space<vmem>>, vector<1x128xf32>
    tpu.vector_store %arg7[%384, %c0_118], %383 {strides = array<i32>} : memref<8x128xf32, #tpu.memory_space<vmem>>, vector<1x128xf32>,
    %386 = arith.addi %0, %c7_i32 : i32
    %387 = arith.index_cast %386 : i32 to index
    %388 = memref.load %arg2[%387] : memref<16xi32, #tpu.memory_space<smem>>
    %389 = arith.index_cast %388 : i32 to index
    %c0_119 = arith.constant 0 : index
    %390 = vector.load %arg4[%389, %c0_119] : memref<48x128xf32, #tpu.memory_space<vmem>>, vector<1x128xf32>
    %391 = arith.index_cast %c7_i32 : i32 to index
    %c0_120 = arith.constant 0 : index
    %392 = vector.load %arg8[%391, %c0_120] : memref<8x128xf32, #tpu.memory_space<vmem>>, vector<1x128xf32>
    tpu.vector_store %arg8[%391, %c0_120], %390 {strides = array<i32>} : memref<8x128xf32, #tpu.memory_space<vmem>>, vector<1x128xf32>,
    %393 = arith.addi %0, %c7_i32 : i32
    %c4_i32_121 = arith.constant 4 : i32
    %394 = arith.muli %393, %c4_i32_121 : i32
    %cst_122 = arith.constant 0.000000e+00 : f32
    %395 = vector.broadcast %cst_122 : f32 to vector<1x128xf32>
    %cst_123 = arith.constant 0.000000e+00 : f32
    %396 = vector.broadcast %cst_123 : f32 to vector<1x128xf32>
    %c0_i32_124 = arith.constant 0 : i32
    %397 = arith.addi %394, %c0_i32_124 : i32
    %398 = arith.index_cast %397 : i32 to index
    %399 = memref.load %arg3[%398] : memref<64xi32, #tpu.memory_space<smem>>
    %400 = arith.index_cast %399 : i32 to index
    %c0_125 = arith.constant 0 : index
    %401 = vector.load %arg4[%400, %c0_125] : memref<48x128xf32, #tpu.memory_space<vmem>>, vector<1x128xf32>
    %402 = arith.addf %395, %401 : vector<1x128xf32>
    %403 = arith.mulf %401, %401 : vector<1x128xf32>
    %404 = arith.addf %396, %403 : vector<1x128xf32>
    %c1_i32_126 = arith.constant 1 : i32
    %405 = arith.addi %394, %c1_i32_126 : i32
    %406 = arith.index_cast %405 : i32 to index
    %407 = memref.load %arg3[%406] : memref<64xi32, #tpu.memory_space<smem>>
    %408 = arith.index_cast %407 : i32 to index
    %c0_127 = arith.constant 0 : index
    %409 = vector.load %arg4[%408, %c0_127] : memref<48x128xf32, #tpu.memory_space<vmem>>, vector<1x128xf32>
    %410 = arith.addf %402, %409 : vector<1x128xf32>
    %411 = arith.mulf %409, %409 : vector<1x128xf32>
    %412 = arith.addf %404, %411 : vector<1x128xf32>
    %c2_i32_128 = arith.constant 2 : i32
    %413 = arith.addi %394, %c2_i32_128 : i32
    %414 = arith.index_cast %413 : i32 to index
    %415 = memref.load %arg3[%414] : memref<64xi32, #tpu.memory_space<smem>>
    %416 = arith.index_cast %415 : i32 to index
    %c0_129 = arith.constant 0 : index
    %417 = vector.load %arg4[%416, %c0_129] : memref<48x128xf32, #tpu.memory_space<vmem>>, vector<1x128xf32>
    %418 = arith.addf %410, %417 : vector<1x128xf32>
    %419 = arith.mulf %417, %417 : vector<1x128xf32>
    %420 = arith.addf %412, %419 : vector<1x128xf32>
    %c3_i32_130 = arith.constant 3 : i32
    %421 = arith.addi %394, %c3_i32_130 : i32
    %422 = arith.index_cast %421 : i32 to index
    %423 = memref.load %arg3[%422] : memref<64xi32, #tpu.memory_space<smem>>
    %424 = arith.index_cast %423 : i32 to index
    %c0_131 = arith.constant 0 : index
    %425 = vector.load %arg4[%424, %c0_131] : memref<48x128xf32, #tpu.memory_space<vmem>>, vector<1x128xf32>
    %426 = arith.addf %418, %425 : vector<1x128xf32>
    %427 = arith.mulf %425, %425 : vector<1x128xf32>
    %428 = arith.addf %420, %427 : vector<1x128xf32>
    %429 = arith.index_cast %c7_i32 : i32 to index
    %c0_132 = arith.constant 0 : index
    %430 = vector.load %arg9[%429, %c0_132] : memref<8x128xf32, #tpu.memory_space<vmem>>, vector<1x128xf32>
    tpu.vector_store %arg9[%429, %c0_132], %426 {strides = array<i32>} : memref<8x128xf32, #tpu.memory_space<vmem>>, vector<1x128xf32>,
    %431 = arith.index_cast %c7_i32 : i32 to index
    %c0_133 = arith.constant 0 : index
    %432 = vector.load %arg10[%431, %c0_133] : memref<8x128xf32, #tpu.memory_space<vmem>>, vector<1x128xf32>
    tpu.vector_store %arg10[%431, %c0_133], %428 {strides = array<i32>} : memref<8x128xf32, #tpu.memory_space<vmem>>, vector<1x128xf32>,
    %c8_i32_134 = arith.constant 8 : i32
    %c0_135 = arith.constant 0 : index
    %c0_136 = arith.constant 0 : index
    %433 = vector.load %arg7[%c0_135, %c0_136] : memref<8x128xf32, #tpu.memory_space<vmem>>, vector<8x128xf32>
    %c0_137 = arith.constant 0 : index
    %c0_138 = arith.constant 0 : index
    %434 = vector.load %arg8[%c0_137, %c0_138] : memref<8x128xf32, #tpu.memory_space<vmem>>, vector<8x128xf32>
    %435 = arith.mulf %433, %434 : vector<8x128xf32>
    %cst_139 = arith.constant dense<0.000000e+00> : vector<8xf32>
    %436 = vector.multi_reduction <add>, %435, %cst_139 [1] : vector<8x128xf32> to vector<8xf32>
    %437 = vector.shape_cast %436 : vector<8xf32> to vector<8x1xf32>
    %c0_140 = arith.constant 0 : index
    %c0_141 = arith.constant 0 : index
    %438 = vector.load %arg9[%c0_140, %c0_141] : memref<8x128xf32, #tpu.memory_space<vmem>>, vector<8x128xf32>
    %439 = arith.mulf %433, %438 : vector<8x128xf32>
    %cst_142 = arith.constant dense<0.000000e+00> : vector<8xf32>
    %440 = vector.multi_reduction <add>, %439, %cst_142 [1] : vector<8x128xf32> to vector<8xf32>
    %441 = vector.shape_cast %440 : vector<8xf32> to vector<8x1xf32>
    %cst_143 = arith.constant 2.500000e-01 : f32
    %442 = vector.broadcast %cst_143 : f32 to vector<8x1xf32>
    %443 = arith.mulf %441, %442 : vector<8x1xf32>
    %444 = arith.mulf %433, %433 : vector<8x128xf32>
    %445 = arith.mulf %434, %434 : vector<8x128xf32>
    %446 = arith.addf %444, %445 : vector<8x128xf32>
    %c0_144 = arith.constant 0 : index
    %c0_145 = arith.constant 0 : index
    %447 = vector.load %arg10[%c0_144, %c0_145] : memref<8x128xf32, #tpu.memory_space<vmem>>, vector<8x128xf32>
    %448 = arith.addf %446, %447 : vector<8x128xf32>
    %cst_146 = arith.constant dense<0.000000e+00> : vector<8xf32>
    %449 = vector.multi_reduction <add>, %448, %cst_146 [1] : vector<8x128xf32> to vector<8xf32>
    %450 = vector.shape_cast %449 : vector<8xf32> to vector<8x1xf32>
    %451 = arith.subf %437, %443 : vector<8x1xf32>
    %cst_147 = arith.constant 0.000000e+00 : f32
    %452 = vector.broadcast %cst_147 : f32 to vector<8x1xf32>
    %453 = arith.minimumf %451, %452 : vector<8x1xf32>
    %454 = math.absf %451 : vector<8x1xf32>
    %cst_148 = arith.constant 0.000000e+00 : f32
    %455 = vector.broadcast %cst_148 : f32 to vector<8x1xf32>
    %456 = arith.subf %455, %454 : vector<8x1xf32>
    %457 = math.exp %456 : vector<8x1xf32>
    %458 = math.log1p %457 : vector<8x1xf32>
    %459 = arith.subf %453, %458 : vector<8x1xf32>
    %c1_i32_149 = arith.constant 1 : i32
    %460 = arith.cmpi eq, %arg0, %c1_i32_149 : i32
    %true = arith.constant true
    %461 = arith.xori %460, %true : i1
    %462 = arith.extui %461 : i1 to i32
    %c0_i32_150 = arith.constant 0 : i32
    %463 = arith.cmpi ne, %462, %c0_i32_150 : i32
    scf.if %463 {
      %466 = vector.shape_cast %459 : vector<8x1xf32> to vector<1x8x1xf32>
      %cst_152 = arith.constant dense<0.000000e+00> : vector<1xf32>
      %467 = vector.multi_reduction <add>, %466, %cst_152 [1, 2] : vector<1x8x1xf32> to vector<1xf32>
      %468 = vector.shape_cast %467 : vector<1xf32> to vector<1x1x1xf32>
      %469 = vector.extract %468[0, 0, 0] : f32 from vector<1x1x1xf32>
      %470 = vector.shape_cast %450 : vector<8x1xf32> to vector<1x8x1xf32>
      %cst_153 = arith.constant dense<0.000000e+00> : vector<1xf32>
      %471 = vector.multi_reduction <add>, %470, %cst_153 [1, 2] : vector<1x8x1xf32> to vector<1xf32>
      %472 = vector.shape_cast %471 : vector<1xf32> to vector<1x1x1xf32>
      %473 = vector.extract %472[0, 0, 0] : f32 from vector<1x1x1xf32>
      %474 = vector.broadcast %469 : f32 to vector<1x8x128xf32>
      %c0_154 = arith.constant 0 : index
      %c0_155 = arith.constant 0 : index
      %c0_156 = arith.constant 0 : index
      %475 = vector.load %arg5[%c0_154, %c0_155, %c0_156] : memref<1x8x128xf32, #tpu.memory_space<vmem>>, vector<1x8x128xf32>
      tpu.vector_store %arg5[%c0_154, %c0_155, %c0_156], %474 {strides = array<i32>} : memref<1x8x128xf32, #tpu.memory_space<vmem>>, vector<1x8x128xf32>,
      %476 = vector.broadcast %473 : f32 to vector<1x8x128xf32>
      %c0_157 = arith.constant 0 : index
      %c0_158 = arith.constant 0 : index
      %c0_159 = arith.constant 0 : index
      %477 = vector.load %arg6[%c0_157, %c0_158, %c0_159] : memref<1x8x128xf32, #tpu.memory_space<vmem>>, vector<1x8x128xf32>
      tpu.vector_store %arg6[%c0_157, %c0_158, %c0_159], %476 {strides = array<i32>} : memref<1x8x128xf32, #tpu.memory_space<vmem>>, vector<1x8x128xf32>,
    } else {
    }
    %464 = arith.extui %460 : i1 to i32
    %c0_i32_151 = arith.constant 0 : i32
    %465 = arith.cmpi ne, %464, %c0_i32_151 : i32
    scf.if %465 {
      %c8_i32_152 = arith.constant 8 : i32
      %466 = arith.muli %arg0, %c8_i32_152 : i32
      %467 = tpu.iota {dimensions = array<i32: 0>} : vector<8x1xi32>
      %468 = vector.broadcast %466 : i32 to vector<8x1xi32>
      %469 = arith.addi %468, %467 : vector<8x1xi32>
      %c12_i32 = arith.constant 12 : i32
      %470 = vector.broadcast %c12_i32 : i32 to vector<8x1xi32>
      %471 = arith.cmpi slt, %469, %470 : vector<8x1xi32>
      %cst_153 = arith.constant 0.000000e+00 : f32
      %472 = vector.broadcast %cst_153 : f32 to vector<8x1xf32>
      %473 = arith.select %471, %459, %472 : vector<8x1xi1>, vector<8x1xf32>
      %474 = vector.shape_cast %473 : vector<8x1xf32> to vector<1x8x1xf32>
      %cst_154 = arith.constant dense<0.000000e+00> : vector<1xf32>
      %475 = vector.multi_reduction <add>, %474, %cst_154 [1, 2] : vector<1x8x1xf32> to vector<1xf32>
      %476 = vector.shape_cast %475 : vector<1xf32> to vector<1x1x1xf32>
      %477 = vector.extract %476[0, 0, 0] : f32 from vector<1x1x1xf32>
      %cst_155 = arith.constant 0.000000e+00 : f32
      %478 = vector.broadcast %cst_155 : f32 to vector<8x1xf32>
      %479 = arith.select %471, %450, %478 : vector<8x1xi1>, vector<8x1xf32>
      %480 = vector.shape_cast %479 : vector<8x1xf32> to vector<1x8x1xf32>
      %cst_156 = arith.constant dense<0.000000e+00> : vector<1xf32>
      %481 = vector.multi_reduction <add>, %480, %cst_156 [1, 2] : vector<1x8x1xf32> to vector<1xf32>
      %482 = vector.shape_cast %481 : vector<1xf32> to vector<1x1x1xf32>
      %483 = vector.extract %482[0, 0, 0] : f32 from vector<1x1x1xf32>
      %484 = vector.broadcast %477 : f32 to vector<1x8x128xf32>
      %c0_157 = arith.constant 0 : index
      %c0_158 = arith.constant 0 : index
      %c0_159 = arith.constant 0 : index
      %485 = vector.load %arg5[%c0_157, %c0_158, %c0_159] : memref<1x8x128xf32, #tpu.memory_space<vmem>>, vector<1x8x128xf32>
      tpu.vector_store %arg5[%c0_157, %c0_158, %c0_159], %484 {strides = array<i32>} : memref<1x8x128xf32, #tpu.memory_space<vmem>>, vector<1x8x128xf32>,
      %486 = vector.broadcast %483 : f32 to vector<1x8x128xf32>
      %c0_160 = arith.constant 0 : index
      %c0_161 = arith.constant 0 : index
      %c0_162 = arith.constant 0 : index
      %487 = vector.load %arg6[%c0_160, %c0_161, %c0_162] : memref<1x8x128xf32, #tpu.memory_space<vmem>>, vector<1x8x128xf32>
      tpu.vector_store %arg6[%c0_160, %c0_161, %c0_162], %486 {strides = array<i32>} : memref<1x8x128xf32, #tpu.memory_space<vmem>>, vector<1x8x128xf32>,
    } else {
    }
    return
  }
  func.func @transform_0(%arg0: i32, %arg1: memref<16xi32, #tpu.memory_space<smem>>, %arg2: memref<16xi32, #tpu.memory_space<smem>>, %arg3: memref<64xi32, #tpu.memory_space<smem>>) -> (i32, i32) {
    %c0_i32 = arith.constant 0 : i32
    %c0_i32_0 = arith.constant 0 : i32
    %c0_i32_1 = arith.constant 0 : i32
    return %c0_i32, %c0_i32_0 : i32, i32
  }
  func.func @transform_1(%arg0: i32, %arg1: memref<16xi32, #tpu.memory_space<smem>>, %arg2: memref<16xi32, #tpu.memory_space<smem>>, %arg3: memref<64xi32, #tpu.memory_space<smem>>) -> (i32, i32, i32) {
    %c0_i32 = arith.constant 0 : i32
    %c0_i32_0 = arith.constant 0 : i32
    %c0_i32_1 = arith.constant 0 : i32
    return %arg0, %c0_i32, %c0_i32_0 : i32, i32, i32
  }
  func.func @transform_2(%arg0: i32, %arg1: memref<16xi32, #tpu.memory_space<smem>>, %arg2: memref<16xi32, #tpu.memory_space<smem>>, %arg3: memref<64xi32, #tpu.memory_space<smem>>) -> (i32, i32, i32) {
    %c0_i32 = arith.constant 0 : i32
    %c0_i32_0 = arith.constant 0 : i32
    %c0_i32_1 = arith.constant 0 : i32
    return %arg0, %c0_i32, %c0_i32_0 : i32, i32, i32
  }
}

</mosaic_0001>

<llo_original>
// kernel: tpu_custom_call.1
$region0: #{tpu_custom_call.1}
  #allocation0 [shape = 'u32[]', space=smem, size = 0x4, offset = 0x4, fixed_abs, tag = 'smem constant byte address 0x4 - core index']
  #allocation1 [shape = 'u32[72,128]{1,0:T(1,128)}', space=vmem, size = 0x9000, scoped, tag = 'internal scratch']
  #allocation2 [shape = 'f32[8,128]{1,0:T(8,128)}', space=vmem, size = 0x1000, scoped, tag = 'scratch operand']
  #allocation3 [shape = 'f32[8,128]{1,0:T(8,128)}', space=vmem, size = 0x1000, scoped, tag = 'scratch operand']
  #allocation4 [shape = 'f32[8,128]{1,0:T(8,128)}', space=vmem, size = 0x1000, scoped, tag = 'scratch operand']
  #allocation5 [shape = 'f32[8,128]{1,0:T(8,128)}', space=vmem, size = 0x1000, scoped, tag = 'scratch operand']
  #allocation6 [shape = 's32[1]{0}', space=sflag, size = 0x4, scoped, tag = 'scoped memory for tpu_custom_call.1']
  #allocation7 [shape = 'u8[512]{0}', space=smem, size = 0x200, scoped, tag = 'prefetched SMEM operand 0']
  #allocation8 [shape = 'u8[512]{0}', space=smem, size = 0x200, scoped, tag = 'prefetched SMEM operand 1']
  #allocation9 [shape = 'u8[512]{0}', space=smem, size = 0x200, scoped, tag = 'prefetched SMEM operand 2']
  %s0 = inlined_call_operand.hbm [shape: s32[16], index: 0, kind: input, shape index: {}]
  %s1 = inlined_call_operand.hbm [shape: s32[16], index: 1, kind: input, shape index: {}]
  %s2 = inlined_call_operand.vmem [shape: s32[64], index: 2, kind: input, shape index: {}]
  %s3 = inlined_call_operand.hbm [shape: f32[48,128], index: 3, kind: input, shape index: {}]
  %s4 = inlined_call_operand.hbm [shape: f32[2,8,128], index: 4, kind: output, shape index: {0}]
  %s5 = inlined_call_operand.hbm [shape: f32[2,8,128], index: 5, kind: output, shape index: {1}]
  %6 = xla_tuple %s4, %s5
  %s7 = sld [smem:[#allocation0]]
  $region57: #{tpu_custom_call.1} parent=0
    _
  %s9 = ssub.s32 1, %s7
  %s10 = scalar_select 0, %s9, %s7
  %s12 = sshll.u32 %s0, 4
  %s13 = int_to_ptr.hbm [resolvable:$true] %s12
  %15 = dma.hbm_to_smem %s13, 16, [#allocation7], [#allocation6]
  %s17 = sshll.u32 %s1, 4
  %s18 = int_to_ptr.hbm [resolvable:$true] %s17
  %20 = dma.hbm_to_smem %s18, 16, [#allocation8], [#allocation6]
  %s22 = sshll.u32 %s2, 4
  %s23 = int_to_ptr.vmem [resolvable:$true] %s22
  %25 = dma.vmem_to_smem %s23, 16, [#allocation9], [#allocation6]
  %27 = dma.done [#allocation6], 48
  %28 = sfence
  $region1: #{tpu_custom_call.1} parent=0
    #allocation10 [shape = 'u8[24576]{0}', space=vmem, size = 0x6000, scoped, tag = 'input window, operand 3, single buffered']
    #allocation11 [shape = 's32[2]{0}', space=sflag, size = 0x8, scoped, tag = 'scoped memory for tpu_custom_call.1']
    #allocation12 [shape = 's32[2]{0}', space=sflag, size = 0x8, scoped, tag = 'scoped memory for tpu_custom_call.1']
    #allocation13 [shape = 'u8[8192]{0}', space=vmem, size = 0x2000, scoped, tag = 'output window, operand 0']
    #allocation14 [shape = 'u8[8192]{0}', space=vmem, size = 0x2000, scoped, tag = 'output window, operand 1']
    #allocation15 [shape = 's32[2]{0}', space=sflag, size = 0x8, scoped, tag = 'scoped memory for tpu_custom_call.1']
    %29 = vsyncpa [#allocation11], 0
    %30 = vsyncpa [#allocation12], 0
    %s31 = scalar_lea.sflag [#allocation12], 1
    %32 = vsyncpa %s31, 0
    %33 = vsyncpa [#allocation15], 0
    %s34 = scalar_lea.sflag [#allocation15], 1
    %35 = vsyncpa %s34, 0
    loop: start=0, step=1, limit=4
    $region2: #{tpu_custom_call.1} parent=1 // loop_pre_header
      _
    $region3: #{tpu_custom_call.1} parent=1 // loop_header
      %s37 = sphi 0, %s41
      %p38 = scmp.ge.s32.totalorder %s37, 4
      %s45 = sphi 0, %s45
      %s47 = sphi 0, %s45
      %s48 = sphi 0, %s47
      %s62 = sphi 0, %s48
      %s68 = sphi 0, %s70
      %s71 = sphi 0, %s68
      %s72 = sphi 0, %s71
      %s88 = sphi 0, %s72
      %s94 = sphi 0, %s96
      %s97 = sphi 0, %s94
      %s98 = sphi 0, %s97
      %s114 = sphi 0, %s98
    $region4: #{tpu_custom_call.1} parent=1 // loop_header_branch
      %40 = sbr.rel (%p38) target = $region8
    $region5: #{tpu_custom_call.1} parent=1 // loop_body
      %s42 = ssub.s32 %s37, 1
      %s43 = ssub.s32 %s37, 2
      %s44 = sadd.s32 %s37, 1
      %s46 = sadd.s32 %s45, 1
      %p49 = scmp.eq.s32.totalorder %s37, 1
      %p50 = scmp.ne.s32.totalorder %s45, %s47
      %p51 = scmp.eq.s32.totalorder %s37, 0
      %p52 = por %p50, %p51
      %p53 = scmp.ne.s32.totalorder %s45, %s47
      %p54 = scmp.eq.s32.totalorder %s42, 1
      %p55 = por %p53, %p54
      %p56 = scmp.ne.s32.totalorder %s47, %s48
      %p57 = scmp.eq.s32.totalorder %s42, 0
      %p58 = por %p56, %p57
      %p59 = scmp.ne.s32.totalorder %s47, %s48
      %p60 = scmp.eq.s32.totalorder %s43, 1
      %p61 = por %p59, %p60
      %p63 = scmp.ne.s32.totalorder %s48, %s62
      %p64 = scmp.eq.s32.totalorder %s43, 0
      %p65 = por %p63, %p64
      %s66 = ssub.s32 %s37, %s44
      %p67 = scmp.eq.s32.totalorder %s66, 0
      %s69 = sadd.s32 %s68, 1
      %s70 = scalar_select %p67, %s68, %s69
      %p73 = pneg %p67
      %p74 = scmp.eq.s32.totalorder %s37, 1
      %p75 = por %p73, %p74
      %p76 = scmp.ne.s32.totalorder %s68, %s71
      %p77 = scmp.eq.s32.totalorder %s37, 0
      %p78 = por %p76, %p77
      %p79 = scmp.ne.s32.totalorder %s68, %s71
      %p80 = scmp.eq.s32.totalorder %s42, 1
      %p81 = por %p79, %p80
      %p82 = scmp.ne.s32.totalorder %s71, %s72
      %p83 = scmp.eq.s32.totalorder %s42, 0
      %p84 = por %p82, %p83
      %p85 = scmp.ne.s32.totalorder %s71, %s72
      %p86 = scmp.eq.s32.totalorder %s43, 1
      %p87 = por %p85, %p86
      %p89 = scmp.ne.s32.totalorder %s72, %s88
      %p90 = scmp.eq.s32.totalorder %s43, 0
      %p91 = por %p89, %p90
      %s92 = ssub.s32 %s37, %s44
      %p93 = scmp.eq.s32.totalorder %s92, 0
      %s95 = sadd.s32 %s94, 1
      %s96 = scalar_select %p93, %s94, %s95
      %p99 = pneg %p93
      %p100 = scmp.eq.s32.totalorder %s37, 1
      %p101 = por %p99, %p100
      %p102 = scmp.ne.s32.totalorder %s94, %s97
      %p103 = scmp.eq.s32.totalorder %s37, 0
      %p104 = por %p102, %p103
      %p105 = scmp.ne.s32.totalorder %s94, %s97
      %p106 = scmp.eq.s32.totalorder %s42, 1
      %p107 = por %p105, %p106
      %p108 = scmp.ne.s32.totalorder %s97, %s98
      %p109 = scmp.eq.s32.totalorder %s42, 0
      %p110 = por %p108, %p109
      %p111 = scmp.ne.s32.totalorder %s97, %s98
      %p112 = scmp.eq.s32.totalorder %s43, 1
      %p113 = por %p111, %p112
      %p115 = scmp.ne.s32.totalorder %s98, %s114
      %p116 = scmp.eq.s32.totalorder %s43, 0
      %p117 = por %p115, %p116
      %p118 = scmp.le.s32.totalorder 1, %s37
      %p119 = scmp.lt.s32.totalorder %s37, 3
      %p120 = pnand %p118, %p119
      %p121 = pneg %p120
      // Predicated region
      $region9: #{tpu_custom_call.1} parent=5 // pred_check
        _
      $region10: #{tpu_custom_call.1} parent=5 // pred_check_branch
        %123 = sbr.rel (%p120) target = $region12
      $region11: #{tpu_custom_call.1} parent=5 // pred_region
        %s124 = ssub.s32 %s37, 1
        // Predicated region
        $region13: #{tpu_custom_call.1} parent=11 // pred_check
          %p125 = pneg %p58
        $region14: #{tpu_custom_call.1} parent=11 // pred_check_branch
          %127 = sbr.rel (%p125) target = $region16
        $region15: #{tpu_custom_call.1} parent=11 // pred_region
          %129 = vsyncadd [#allocation11], 0
          %s130 = sshll.u32 %s3, 4
          %s131 = int_to_ptr.hbm [resolvable:$true] %s130
          %s132 = sshll.u32 [#allocation10], 4
          %s133 = int_to_ptr.vmem [resolvable:$true] %s132
          %138 = dma.hbm_to_vmem [thread:$0]  %s131, 768, %s133, [#allocation11], 128, 128, 8
        $region16: #{tpu_custom_call.1} parent=11 // pred_fallthru
          _
      $region12: #{tpu_custom_call.1} parent=5 // pred_fallthru
        _
      %p139 = scmp.lt.s32.totalorder %s37, 2
      // Predicated region
      $region17: #{tpu_custom_call.1} parent=5 // pred_check
        %p140 = pneg %p139
      $region18: #{tpu_custom_call.1} parent=5 // pred_check_branch
        %142 = sbr.rel (%p140) target = $region20
      $region19: #{tpu_custom_call.1} parent=5 // pred_region
        _
      $region20: #{tpu_custom_call.1} parent=5 // pred_fallthru
        _
      %p143 = scmp.le.s32.totalorder 1, %s37
      %p144 = scmp.lt.s32.totalorder %s37, 3
      %p145 = pnand %p143, %p144
      %p146 = pneg %p145
      // Predicated region
      $region21: #{tpu_custom_call.1} parent=5 // pred_check
        _
      $region22: #{tpu_custom_call.1} parent=5 // pred_check_branch
        %148 = sbr.rel (%p145) target = $region24
      $region23: #{tpu_custom_call.1} parent=5 // pred_region
        %s149 = ssub.s32 %s37, 1
        // Predicated region
        $region25: #{tpu_custom_call.1} parent=23 // pred_check
          %p150 = pneg %p58
        $region26: #{tpu_custom_call.1} parent=23 // pred_check_branch
          %152 = sbr.rel (%p150) target = $region28
        $region27: #{tpu_custom_call.1} parent=23 // pred_region
          %154 = dma.done [#allocation11], 768
        $region28: #{tpu_custom_call.1} parent=23 // pred_fallthru
          _
        %p155 = pneg %p58
        %p156 = pneg %p55
        %p157 = pneg %p84
        %p158 = pneg %p81
        %s159 = sand.u32 %s71, 1
        %s160 = scalar_lea.sflag [#allocation12], %s159
        %s161 = sand.u32 %s71, 1
        %s162 = smul.addr %s161, 8
        %s163 = scalar_lea.vmem [#allocation13], %s162
        %p164 = pneg %p110
        %p165 = pneg %p107
        %s166 = sand.u32 %s97, 1
        %s167 = scalar_lea.sflag [#allocation15], %s166
        %s168 = sand.u32 %s97, 1
        %s169 = smul.addr %s168, 8
        %s170 = scalar_lea.vmem [#allocation14], %s169
        %s171 = smul.u32 %s42, 8
        %s172 = sld [smem:[#allocation7 + %s171]]
        %s173 = scalar_lea.vmem [#allocation10], %s172
        %v174 = vld [vmem:[%s173] sm:$0x1]
        %175 = vst [vmem:[#allocation2] sm:$0x1] %v174
        %s176 = sld [smem:[#allocation8 + %s171]]
        %s177 = scalar_lea.vmem [#allocation10], %s176
        %v178 = vld [vmem:[%s177] sm:$0x1]
        %179 = vst [vmem:[#allocation3] sm:$0x1] %v178
        %s180 = smul.u32 %s42, 32
        %s181 = sld [smem:[#allocation9 + %s180]]
        %s182 = scalar_lea.vmem [#allocation10], %s181
        %v183 = vld [vmem:[%s182] sm:$0x1]
        %v184 = vadd.f32 %v183, 0.0
        %v185 = vmul.f32 %v183, %v183
        %v186 = vadd.f32 %v185, 0.0
        %s187 = sadd.s32 %s180, 1
        %s188 = sld [smem:[#allocation9 + %s187]]
        %s189 = scalar_lea.vmem [#allocation10], %s188
        %v190 = vld [vmem:[%s189] sm:$0x1]
        %v191 = vadd.f32 %v184, %v190
        %v192 = vmul.f32 %v190, %v190
        %v193 = vadd.f32 %v186, %v192
        %s194 = sadd.s32 %s180, 2
        %s195 = sld [smem:[#allocation9 + %s194]]
        %s196 = scalar_lea.vmem [#allocation10], %s195
        %v197 = vld [vmem:[%s196] sm:$0x1]
        %v198 = vadd.f32 %v191, %v197
        %v199 = vmul.f32 %v197, %v197
        %v200 = vadd.f32 %v193, %v199
        %s201 = sadd.s32 %s180, 3
        %s202 = sld [smem:[#allocation9 + %s201]]
        %s203 = scalar_lea.vmem [#allocation10], %s202
        %v204 = vld [vmem:[%s203] sm:$0x1]
        %v205 = vadd.f32 %v198, %v204
        %v206 = vmul.f32 %v204, %v204
        %v207 = vadd.f32 %v200, %v206
        %208 = vst [vmem:[#allocation4] sm:$0x1] %v205
        %209 = vst [vmem:[#allocation5] sm:$0x1] %v207
        %s210 = sadd.s32 %s171, 1
        %s211 = sld [smem:[#allocation7 + %s210]]
        %s212 = scalar_lea.vmem [#allocation10], %s211
        %v213 = vld [vmem:[%s212] sm:$0x1]
        %214 = vst [vmem:[#allocation2 + $0x1] sm:$0x1] %v213
        %s215 = sld [smem:[#allocation8 + %s210]]
        %s216 = scalar_lea.vmem [#allocation10], %s215
        %v217 = vld [vmem:[%s216] sm:$0x1]
        %218 = vst [vmem:[#allocation3 + $0x1] sm:$0x1] %v217
        %s219 = smul.u32 %s210, 4
        %s220 = sld [smem:[#allocation9 + %s219]]
        %s221 = scalar_lea.vmem [#allocation10], %s220
        %v222 = vld [vmem:[%s221] sm:$0x1]
        %v223 = vadd.f32 %v222, 0.0
        %v224 = vmul.f32 %v222, %v222
        %v225 = vadd.f32 %v224, 0.0
        %s226 = sadd.s32 %s219, 1
        %s227 = sld [smem:[#allocation9 + %s226]]
        %s228 = scalar_lea.vmem [#allocation10], %s227
        %v229 = vld [vmem:[%s228] sm:$0x1]
        %v230 = vadd.f32 %v223, %v229
        %v231 = vmul.f32 %v229, %v229
        %v232 = vadd.f32 %v225, %v231
        %s233 = sadd.s32 %s219, 2
        %s234 = sld [smem:[#allocation9 + %s233]]
        %s235 = scalar_lea.vmem [#allocation10], %s234
        %v236 = vld [vmem:[%s235] sm:$0x1]
        %v237 = vadd.f32 %v230, %v236
        %v238 = vmul.f32 %v236, %v236
        %v239 = vadd.f32 %v232, %v238
        %s240 = sadd.s32 %s219, 3
        %s241 = sld [smem:[#allocation9 + %s240]]
        %s242 = scalar_lea.vmem [#allocation10], %s241
        %v243 = vld [vmem:[%s242] sm:$0x1]
        %v244 = vadd.f32 %v237, %v243
        %v245 = vmul.f32 %v243, %v243
        %v246 = vadd.f32 %v239, %v245
        %247 = vst [vmem:[#allocation4 + $0x1] sm:$0x1] %v244
        %248 = vst [vmem:[#allocation5 + $0x1] sm:$0x1] %v246
        %s249 = sadd.s32 %s171, 2
        %s250 = sld [smem:[#allocation7 + %s249]]
        %s251 = scalar_lea.vmem [#allocation10], %s250
        %v252 = vld [vmem:[%s251] sm:$0x1]
        %253 = vst [vmem:[#allocation2 + $0x2] sm:$0x1] %v252
        %s254 = sld [smem:[#allocation8 + %s249]]
        %s255 = scalar_lea.vmem [#allocation10], %s254
        %v256 = vld [vmem:[%s255] sm:$0x1]
        %257 = vst [vmem:[#allocation3 + $0x2] sm:$0x1] %v256
        %s258 = smul.u32 %s249, 4
        %s259 = sld [smem:[#allocation9 + %s258]]
        %s260 = scalar_lea.vmem [#allocation10], %s259
        %v261 = vld [vmem:[%s260] sm:$0x1]
        %v262 = vadd.f32 %v261, 0.0
        %v263 = vmul.f32 %v261, %v261
        %v264 = vadd.f32 %v263, 0.0
        %s265 = sadd.s32 %s258, 1
        %s266 = sld [smem:[#allocation9 + %s265]]
        %s267 = scalar_lea.vmem [#allocation10], %s266
        %v268 = vld [vmem:[%s267] sm:$0x1]
        %v269 = vadd.f32 %v262, %v268
        %v270 = vmul.f32 %v268, %v268
        %v271 = vadd.f32 %v264, %v270
        %s272 = sadd.s32 %s258, 2
        %s273 = sld [smem:[#allocation9 + %s272]]
        %s274 = scalar_lea.vmem [#allocation10], %s273
        %v275 = vld [vmem:[%s274] sm:$0x1]
        %v276 = vadd.f32 %v269, %v275
        %v277 = vmul.f32 %v275, %v275
        %v278 = vadd.f32 %v271, %v277
        %s279 = sadd.s32 %s258, 3
        %s280 = sld [smem:[#allocation9 + %s279]]
        %s281 = scalar_lea.vmem [#allocation10], %s280
        %v282 = vld [vmem:[%s281] sm:$0x1]
        %v283 = vadd.f32 %v276, %v282
        %v284 = vmul.f32 %v282, %v282
        %v285 = vadd.f32 %v278, %v284
        %286 = vst [vmem:[#allocation4 + $0x2] sm:$0x1] %v283
        %287 = vst [vmem:[#allocation5 + $0x2] sm:$0x1] %v285
        %s288 = sadd.s32 %s171, 3
        %s289 = sld [smem:[#allocation7 + %s288]]
        %s290 = scalar_lea.vmem [#allocation10], %s289
        %v291 = vld [vmem:[%s290] sm:$0x1]
        %292 = vst [vmem:[#allocation2 + $0x3] sm:$0x1] %v291
        %s293 = sld [smem:[#allocation8 + %s288]]
        %s294 = scalar_lea.vmem [#allocation10], %s293
        %v295 = vld [vmem:[%s294] sm:$0x1]
        %296 = vst [vmem:[#allocation3 + $0x3] sm:$0x1] %v295
        %s297 = smul.u32 %s288, 4
        %s298 = sld [smem:[#allocation9 + %s297]]
        %s299 = scalar_lea.vmem [#allocation10], %s298
        %v300 = vld [vmem:[%s299] sm:$0x1]
        %v301 = vadd.f32 %v300, 0.0
        %v302 = vmul.f32 %v300, %v300
        %v303 = vadd.f32 %v302, 0.0
        %s304 = sadd.s32 %s297, 1
        %s305 = sld [smem:[#allocation9 + %s304]]
        %s306 = scalar_lea.vmem [#allocation10], %s305
        %v307 = vld [vmem:[%s306] sm:$0x1]
        %v308 = vadd.f32 %v301, %v307
        %v309 = vmul.f32 %v307, %v307
        %v310 = vadd.f32 %v303, %v309
        %s311 = sadd.s32 %s297, 2
        %s312 = sld [smem:[#allocation9 + %s311]]
        %s313 = scalar_lea.vmem [#allocation10], %s312
        %v314 = vld [vmem:[%s313] sm:$0x1]
        %v315 = vadd.f32 %v308, %v314
        %v316 = vmul.f32 %v314, %v314
        %v317 = vadd.f32 %v310, %v316
        %s318 = sadd.s32 %s297, 3
        %s319 = sld [smem:[#allocation9 + %s318]]
        %s320 = scalar_lea.vmem [#allocation10], %s319
        %v321 = vld [vmem:[%s320] sm:$0x1]
        %v322 = vadd.f32 %v315, %v321
        %v323 = vmul.f32 %v321, %v321
        %v324 = vadd.f32 %v317, %v323
        %325 = vst [vmem:[#allocation4 + $0x3] sm:$0x1] %v322
        %326 = vst [vmem:[#allocation5 + $0x3] sm:$0x1] %v324
        %s327 = sadd.s32 %s171, 4
        %s328 = sld [smem:[#allocation7 + %s327]]
        %s329 = scalar_lea.vmem [#allocation10], %s328
        %v330 = vld [vmem:[%s329] sm:$0x1]
        %331 = vst [vmem:[#allocation2 + $0x4] sm:$0x1] %v330
        %s332 = sld [smem:[#allocation8 + %s327]]
        %s333 = scalar_lea.vmem [#allocation10], %s332
        %v334 = vld [vmem:[%s333] sm:$0x1]
        %335 = vst [vmem:[#allocation3 + $0x4] sm:$0x1] %v334
        %s336 = smul.u32 %s327, 4
        %s337 = sld [smem:[#allocation9 + %s336]]
        %s338 = scalar_lea.vmem [#allocation10], %s337
        %v339 = vld [vmem:[%s338] sm:$0x1]
        %v340 = vadd.f32 %v339, 0.0
        %v341 = vmul.f32 %v339, %v339
        %v342 = vadd.f32 %v341, 0.0
        %s343 = sadd.s32 %s336, 1
        %s344 = sld [smem:[#allocation9 + %s343]]
        %s345 = scalar_lea.vmem [#allocation10], %s344
        %v346 = vld [vmem:[%s345] sm:$0x1]
        %v347 = vadd.f32 %v340, %v346
        %v348 = vmul.f32 %v346, %v346
        %v349 = vadd.f32 %v342, %v348
        %s350 = sadd.s32 %s336, 2
        %s351 = sld [smem:[#allocation9 + %s350]]
        %s352 = scalar_lea.vmem [#allocation10], %s351
        %v353 = vld [vmem:[%s352] sm:$0x1]
        %v354 = vadd.f32 %v347, %v353
        %v355 = vmul.f32 %v353, %v353
        %v356 = vadd.f32 %v349, %v355
        %s357 = sadd.s32 %s336, 3
        %s358 = sld [smem:[#allocation9 + %s357]]
        %s359 = scalar_lea.vmem [#allocation10], %s358
        %v360 = vld [vmem:[%s359] sm:$0x1]
        %v361 = vadd.f32 %v354, %v360
        %v362 = vmul.f32 %v360, %v360
        %v363 = vadd.f32 %v356, %v362
        %364 = vst [vmem:[#allocation4 + $0x4] sm:$0x1] %v361
        %365 = vst [vmem:[#allocation5 + $0x4] sm:$0x1] %v363
        %s366 = sadd.s32 %s171, 5
        %s367 = sld [smem:[#allocation7 + %s366]]
        %s368 = scalar_lea.vmem [#allocation10], %s367
        %v369 = vld [vmem:[%s368] sm:$0x1]
        %370 = vst [vmem:[#allocation2 + $0x5] sm:$0x1] %v369
        %s371 = sld [smem:[#allocation8 + %s366]]
        %s372 = scalar_lea.vmem [#allocation10], %s371
        %v373 = vld [vmem:[%s372] sm:$0x1]
        %374 = vst [vmem:[#allocation3 + $0x5] sm:$0x1] %v373
        %s375 = smul.u32 %s366, 4
        %s376 = sld [smem:[#allocation9 + %s375]]
        %s377 = scalar_lea.vmem [#allocation10], %s376
        %v378 = vld [vmem:[%s377] sm:$0x1]
        %v379 = vadd.f32 %v378, 0.0
        %v380 = vmul.f32 %v378, %v378
        %v381 = vadd.f32 %v380, 0.0
        %s382 = sadd.s32 %s375, 1
        %s383 = sld [smem:[#allocation9 + %s382]]
        %s384 = scalar_lea.vmem [#allocation10], %s383
        %v385 = vld [vmem:[%s384] sm:$0x1]
        %v386 = vadd.f32 %v379, %v385
        %v387 = vmul.f32 %v385, %v385
        %v388 = vadd.f32 %v381, %v387
        %s389 = sadd.s32 %s375, 2
        %s390 = sld [smem:[#allocation9 + %s389]]
        %s391 = scalar_lea.vmem [#allocation10], %s390
        %v392 = vld [vmem:[%s391] sm:$0x1]
        %v393 = vadd.f32 %v386, %v392
        %v394 = vmul.f32 %v392, %v392
        %v395 = vadd.f32 %v388, %v394
        %s396 = sadd.s32 %s375, 3
        %s397 = sld [smem:[#allocation9 + %s396]]
        %s398 = scalar_lea.vmem [#allocation10], %s397
        %v399 = vld [vmem:[%s398] sm:$0x1]
        %v400 = vadd.f32 %v393, %v399
        %v401 = vmul.f32 %v399, %v399
        %v402 = vadd.f32 %v395, %v401
        %403 = vst [vmem:[#allocation4 + $0x5] sm:$0x1] %v400
        %404 = vst [vmem:[#allocation5 + $0x5] sm:$0x1] %v402
        %s405 = sadd.s32 %s171, 6
        %s406 = sld [smem:[#allocation7 + %s405]]
        %s407 = scalar_lea.vmem [#allocation10], %s406
        %v408 = vld [vmem:[%s407] sm:$0x1]
        %409 = vst [vmem:[#allocation2 + $0x6] sm:$0x1] %v408
        %s410 = sld [smem:[#allocation8 + %s405]]
        %s411 = scalar_lea.vmem [#allocation10], %s410
        %v412 = vld [vmem:[%s411] sm:$0x1]
        %413 = vst [vmem:[#allocation3 + $0x6] sm:$0x1] %v412
        %s414 = smul.u32 %s405, 4
        %s415 = sld [smem:[#allocation9 + %s414]]
        %s416 = scalar_lea.vmem [#allocation10], %s415
        %v417 = vld [vmem:[%s416] sm:$0x1]
        %v418 = vadd.f32 %v417, 0.0
        %v419 = vmul.f32 %v417, %v417
        %v420 = vadd.f32 %v419, 0.0
        %s421 = sadd.s32 %s414, 1
        %s422 = sld [smem:[#allocation9 + %s421]]
        %s423 = scalar_lea.vmem [#allocation10], %s422
        %v424 = vld [vmem:[%s423] sm:$0x1]
        %v425 = vadd.f32 %v418, %v424
        %v426 = vmul.f32 %v424, %v424
        %v427 = vadd.f32 %v420, %v426
        %s428 = sadd.s32 %s414, 2
        %s429 = sld [smem:[#allocation9 + %s428]]
        %s430 = scalar_lea.vmem [#allocation10], %s429
        %v431 = vld [vmem:[%s430] sm:$0x1]
        %v432 = vadd.f32 %v425, %v431
        %v433 = vmul.f32 %v431, %v431
        %v434 = vadd.f32 %v427, %v433
        %s435 = sadd.s32 %s414, 3
        %s436 = sld [smem:[#allocation9 + %s435]]
        %s437 = scalar_lea.vmem [#allocation10], %s436
        %v438 = vld [vmem:[%s437] sm:$0x1]
        %v439 = vadd.f32 %v432, %v438
        %v440 = vmul.f32 %v438, %v438
        %v441 = vadd.f32 %v434, %v440
        %442 = vst [vmem:[#allocation4 + $0x6] sm:$0x1] %v439
        %443 = vst [vmem:[#allocation5 + $0x6] sm:$0x1] %v441
        %s444 = sadd.s32 %s171, 7
        %s445 = sld [smem:[#allocation7 + %s444]]
        %s446 = scalar_lea.vmem [#allocation10], %s445
        %v447 = vld [vmem:[%s446] sm:$0x1]
        %448 = vst [vmem:[#allocation2 + $0x7] sm:$0x1] %v447
        %s449 = sld [smem:[#allocation8 + %s444]]
        %s450 = scalar_lea.vmem [#allocation10], %s449
        %v451 = vld [vmem:[%s450] sm:$0x1]
        %452 = vst [vmem:[#allocation3 + $0x7] sm:$0x1] %v451
        %s453 = smul.u32 %s444, 4
        %s454 = sld [smem:[#allocation9 + %s453]]
        %s455 = scalar_lea.vmem [#allocation10], %s454
        %v456 = vld [vmem:[%s455] sm:$0x1]
        %v457 = vadd.f32 %v456, 0.0
        %v458 = vmul.f32 %v456, %v456
        %v459 = vadd.f32 %v458, 0.0
        %s460 = sadd.s32 %s453, 1
        %s461 = sld [smem:[#allocation9 + %s460]]
        %s462 = scalar_lea.vmem [#allocation10], %s461
        %v463 = vld [vmem:[%s462] sm:$0x1]
        %v464 = vadd.f32 %v457, %v463
        %v465 = vmul.f32 %v463, %v463
        %v466 = vadd.f32 %v459, %v465
        %s467 = sadd.s32 %s453, 2
        %s468 = sld [smem:[#allocation9 + %s467]]
        %s469 = scalar_lea.vmem [#allocation10], %s468
        %v470 = vld [vmem:[%s469] sm:$0x1]
        %v471 = vadd.f32 %v464, %v470
        %v472 = vmul.f32 %v470, %v470
        %v473 = vadd.f32 %v466, %v472
        %s474 = sadd.s32 %s453, 3
        %s475 = sld [smem:[#allocation9 + %s474]]
        %s476 = scalar_lea.vmem [#allocation10], %s475
        %v477 = vld [vmem:[%s476] sm:$0x1]
        %v478 = vadd.f32 %v471, %v477
        %v479 = vmul.f32 %v477, %v477
        %v480 = vadd.f32 %v473, %v479
        %481 = vst [vmem:[#allocation4 + $0x7] sm:$0x1] %v478
        %482 = vst [vmem:[#allocation5 + $0x7] sm:$0x1] %v480
        %v483 = vld [vmem:[#allocation2] sm:$0xff]
        %v484 = vld [vmem:[#allocation3] sm:$0xff]
        %v485 = vmul.f32 %v483, %v484
        %486 = vadd.xlane.f32.xlu0 %v485
        %v487 = vpop.xlane.xlu0 %486
        %v488 = vld [vmem:[#allocation4] sm:$0xff]
        %v489 = vmul.f32 %v483, %v488
        %490 = vadd.xlane.f32.xlu0 %v489
        %v491 = vpop.xlane.xlu0 %490
        %v492 = vmul.f32 %v491, 0.25
        %v493 = vmul.f32 %v483, %v483
        %v494 = vmul.f32 %v484, %v484
        %v495 = vadd.f32 %v493, %v494
        %v496 = vld [vmem:[#allocation5] sm:$0xff]
        %v497 = vadd.f32 %v495, %v496
        %498 = vadd.xlane.f32.xlu0 %v497
        %v499 = vpop.xlane.xlu0 %498
        %v500 = vsub.f32 %v487, %v492
        %v501 = vmin.f32 %v500, 0.0
        %v502 = vand.u32 2147483647, %v500
        %v503 = vsub.f32 0.0, %v502
        %v504 = vmul.f32 %v503, 1.442695
        %v505 = vpow.pop %v504
        %v506 = vadd.f32 %v505, 1.0
        %v507 = vlog2.pop %v506
        %v508 = vmul.f32 %v507, 0.6931472
        %v509 = vmul.f32 -0.5, %v505
        %v510 = vadd.f32 %v509, 1.0
        %v511 = vmul.f32 %v510, %v505
        %v512 = vand.u32 2147483647, %v505
        %vm513 = vcmp.lt.f32.partialorder %v512, 0.0004427343
        %v514 = vsel %vm513, %v511, %v508
        %v515 = vsub.f32 %v501, %v514
        %p516 = scmp.eq.s32.totalorder %s42, 1
        %p517 = scmp.ne.s32.totalorder %s42, 1
        // Predicated region
        $region29: #{tpu_custom_call.1} parent=23 // pred_check
          %p518 = pneg %p517
        $region30: #{tpu_custom_call.1} parent=23 // pred_check_branch
          %520 = sbr.rel (%p518) target = $region32
        $region31: #{tpu_custom_call.1} parent=23 // pred_region
          %vm521 = vcmask 7168
          %v522 = vsel %vm521, %v515, 0.0
          %523 = vadd.xlane.f32.xlu0 %v522
          %v524 = vpop.xlane.xlu0 %523
          %v525 = vrot.slane %v524, 4
          %v526 = vadd.f32 %v524, %v525
          %v527 = vrot.slane %v526, 2
          %v528 = vadd.f32 %v526, %v527
          %v529 = vrot.slane %v528, 1
          %v530 = vadd.f32 %v528, %v529
          %s531 = vtos %v530
          %v532 = vsel %vm521, %v499, 0.0
          %533 = vadd.xlane.f32.xlu0 %v532
          %v534 = vpop.xlane.xlu0 %533
          %v535 = vrot.slane %v534, 4
          %v536 = vadd.f32 %v534, %v535
          %v537 = vrot.slane %v536, 2
          %v538 = vadd.f32 %v536, %v537
          %v539 = vrot.slane %v538, 1
          %v540 = vadd.f32 %v538, %v539
          %s541 = vtos %v540
          %v542 = vstv %s531
          %543 = vst [vmem:[%s163] sm:$0xff] %v542
          %v544 = vstv %s541
          %545 = vst [vmem:[%s170] sm:$0xff] %v544
        $region32: #{tpu_custom_call.1} parent=23 // pred_fallthru
          _
        // Predicated region
        $region33: #{tpu_custom_call.1} parent=23 // pred_check
          %p546 = pneg %p516
        $region34: #{tpu_custom_call.1} parent=23 // pred_check_branch
          %548 = sbr.rel (%p546) target = $region36
        $region35: #{tpu_custom_call.1} parent=23 // pred_region
          %v549 = vlaneseq
          %v550 = vshrl.u32 %v549, 7
          %v551 = vstv %s171
          %v552 = vadd.s32 %v551, %v550
          %vm553 = vcmp.lt.s32.totalorder %v552, 12
          %v554 = vsel %vm553, %v515, 0.0
          %vm555 = vcmask 7168
          %v556 = vsel %vm555, %v554, 0.0
          %557 = vadd.xlane.f32.xlu0 %v556
          %v558 = vpop.xlane.xlu0 %557
          %v559 = vrot.slane %v558, 4
          %v560 = vadd.f32 %v558, %v559
          %v561 = vrot.slane %v560, 2
          %v562 = vadd.f32 %v560, %v561
          %v563 = vrot.slane %v562, 1
          %v564 = vadd.f32 %v562, %v563
          %s565 = vtos %v564
          %v566 = vsel %vm553, %v499, 0.0
          %v567 = vsel %vm555, %v566, 0.0
          %568 = vadd.xlane.f32.xlu0 %v567
          %v569 = vpop.xlane.xlu0 %568
          %v570 = vrot.slane %v569, 4
          %v571 = vadd.f32 %v569, %v570
          %v572 = vrot.slane %v571, 2
          %v573 = vadd.f32 %v571, %v572
          %v574 = vrot.slane %v573, 1
          %v575 = vadd.f32 %v573, %v574
          %s576 = vtos %v575
          %v577 = vstv %s565
          %578 = vst [vmem:[%s163] sm:$0xff] %v577
          %v579 = vstv %s576
          %580 = vst [vmem:[%s170] sm:$0xff] %v579
        $region36: #{tpu_custom_call.1} parent=23 // pred_fallthru
          _
        %s581 = sand.u32 %s71, 1
        %s582 = scalar_lea.sflag [#allocation12], %s581
        %s583 = sand.u32 %s71, 1
        %s584 = smul.addr %s583, 8
        %s585 = scalar_lea.vmem [#allocation13], %s584
        %s586 = sand.u32 %s97, 1
        %s587 = scalar_lea.sflag [#allocation15], %s586
        %s588 = sand.u32 %s97, 1
        %s589 = smul.addr %s588, 8
        %s590 = scalar_lea.vmem [#allocation14], %s589
        // Predicated region
        $region37: #{tpu_custom_call.1} parent=23 // pred_check
          %p591 = pneg %p81
        $region38: #{tpu_custom_call.1} parent=23 // pred_check_branch
          %593 = sbr.rel (%p591) target = $region40
        $region39: #{tpu_custom_call.1} parent=23 // pred_region
          %595 = vsyncadd %s582, 0
          %s596 = smul.addr %s42, 8
          %s597 = scalar_lea.hbm %s4, %s596
          %s599 = sshll.u32 %s585, 4
          %s600 = int_to_ptr.vmem [resolvable:$true] %s599
          %s601 = sshll.u32 %s597, 4
          %s602 = int_to_ptr.hbm [resolvable:$true] %s601
          %604 = dma.vmem_to_hbm [thread:$0]  %s600, 128, %s602, %s582
        $region40: #{tpu_custom_call.1} parent=23 // pred_fallthru
          _
        // Predicated region
        $region41: #{tpu_custom_call.1} parent=23 // pred_check
          %p605 = pneg %p107
        $region42: #{tpu_custom_call.1} parent=23 // pred_check_branch
          %607 = sbr.rel (%p605) target = $region44
        $region43: #{tpu_custom_call.1} parent=23 // pred_region
          %609 = vsyncadd %s587, 0
          %s610 = smul.addr %s42, 8
          %s611 = scalar_lea.hbm %s5, %s610
          %s613 = sshll.u32 %s590, 4
          %s614 = int_to_ptr.vmem [resolvable:$true] %s613
          %s615 = sshll.u32 %s611, 4
          %s616 = int_to_ptr.hbm [resolvable:$true] %s615
          %618 = dma.vmem_to_hbm [thread:$0]  %s614, 128, %s616, %s587
        $region44: #{tpu_custom_call.1} parent=23 // pred_fallthru
          _
      $region24: #{tpu_custom_call.1} parent=5 // pred_fallthru
        _
      %p619 = scmp.le.s32.totalorder 2, %s37
      // Predicated region
      $region45: #{tpu_custom_call.1} parent=5 // pred_check
        %p620 = pneg %p619
      $region46: #{tpu_custom_call.1} parent=5 // pred_check_branch
        %622 = sbr.rel (%p620) target = $region48
      $region47: #{tpu_custom_call.1} parent=5 // pred_region
        %s623 = ssub.s32 %s37, 2
        // Predicated region
        $region49: #{tpu_custom_call.1} parent=47 // pred_check
          %p624 = pneg %p87
        $region50: #{tpu_custom_call.1} parent=47 // pred_check_branch
          %626 = sbr.rel (%p624) target = $region52
        $region51: #{tpu_custom_call.1} parent=47 // pred_region
          %s627 = sand.u32 %s72, 1
          %s628 = scalar_lea.sflag [#allocation12], %s627
          %s629 = sand.u32 %s72, 1
          %s630 = smul.addr %s629, 8
          %s631 = scalar_lea.vmem [#allocation13], %s630
          %633 = dma.done %s628, 128
        $region52: #{tpu_custom_call.1} parent=47 // pred_fallthru
          _
        // Predicated region
        $region53: #{tpu_custom_call.1} parent=47 // pred_check
          %p634 = pneg %p113
        $region54: #{tpu_custom_call.1} parent=47 // pred_check_branch
          %636 = sbr.rel (%p634) target = $region56
        $region55: #{tpu_custom_call.1} parent=47 // pred_region
          %s637 = sand.u32 %s98, 1
          %s638 = scalar_lea.sflag [#allocation15], %s637
          %s639 = sand.u32 %s98, 1
          %s640 = smul.addr %s639, 8
          %s641 = scalar_lea.vmem [#allocation14], %s640
          %643 = dma.done %s638, 128
        $region56: #{tpu_custom_call.1} parent=47 // pred_fallthru
          _
      $region48: #{tpu_custom_call.1} parent=5 // pred_fallthru
        _
    $region6: #{tpu_custom_call.1} parent=1 // loop_footer
      %s41 = sadd.s32 1, %s37
    $region7: #{tpu_custom_call.1} parent=1 // loop_footer_branch
      %36 = sbr.rel target = $region3
    $region8: #{tpu_custom_call.1} parent=1 // loop_exit
      _
    %644 = vsyncpa [#allocation11], 1
    %s645 = scalar_lea.sflag [#allocation11], 1
    %646 = vsyncpa %s645, 1
    %647 = vsyncpa [#allocation12], 1
    %s648 = scalar_lea.sflag [#allocation12], 1
    %649 = vsyncpa %s648, 1
    %650 = vsyncpa [#allocation15], 1
    %s651 = scalar_lea.sflag [#allocation15], 1
    %652 = vsyncpa %s651, 1

</llo_original>
